<compile_context>
chip_gen: v7x
topology: tpu7x:2x2x1
jax: 0.10.0
libtpu: 0.0.40
codegen_flags: <defaults>
</compile_context>

<pallas_src>
import jax
import jax.numpy as jnp
from jax import lax
from jax.experimental import pallas as pl
from jax.experimental.pallas import tpu as pltpu


def _round_up(n, m):
    return ((n + m - 1) // m) * m


def _pick_row_tile(h):
    for t in (8, 16, 6, 4, 3, 2, 1):
        if h % t == 0:
            return t
    return 1


def _vmem_limit_bytes():
    # ~100 MiB ceiling on v5e/v6e (128 MiB physical), ~48 MiB on v7x (64 MiB).
    try:
        cap = int(pltpu.get_tpu_info().vmem_capacity_bytes)
        return min(100 * 1024 * 1024, (cap * 3) // 4)
    except Exception:
        return None


# ------------------------------- kernel ------------------------------------ #

def _make_fused_kernel(*, H, W, TH, Kd, n1, Ntot, need_s, need_e, compute_dtype):
    """Row-tiled fused 1x1 proj + merged-head 3x3 conv + per-head epilogues."""
    n_tiles = H // TH

    def kernel(*refs):
        # refs: x, w_pix, b_pix, wh3, bh, out_keysel, [out_shr], mp_scratch
        x_ref, wpix_ref, bpix_ref, wh3_ref, bh_ref = refs[:5]
        ko_ref = refs[5]
        so_ref = refs[6] if need_s else None
        mp_ref = refs[6 + int(need_s)]          # (H+2, W+2, Cmid) padded mid

        Cin = x_ref.shape[-1]
        Cmid = wpix_ref.shape[1]

        # ---- halo-only zeroing (interior is fully overwritten by pass 1) ----
        mp_ref[0:1] = jnp.zeros((1, W + 2, Cmid), mp_ref.dtype)
        mp_ref[H + 1:H + 2] = jnp.zeros((1, W + 2, Cmid), mp_ref.dtype)
        mp_ref[:, 0:1, :] = jnp.zeros((H + 2, 1, Cmid), mp_ref.dtype)
        mp_ref[:, W + 1:W + 2, :] = jnp.zeros((H + 2, 1, Cmid), mp_ref.dtype)

        # ---- pass 1: row-tiled 1x1 conv (pix_feat_proj) into mp_ref interior ----
        wpix = wpix_ref[...]                    # (Cin, Cmid), compute dtype
        bpix = bpix_ref[...]                    # (1, Cmid), f32

        def mid_tile(t, c):
            r0 = t * TH
            # in-kernel cast: x stays f32 in HBM, VPU-cast here (no extra HBM pass)
            xt = x_ref[0, pl.ds(r0, TH)].astype(compute_dtype)      # (TH, W, Cin)
            mid = jnp.dot(xt.reshape(TH * W, Cin), wpix,
                          preferred_element_type=jnp.float32) + bpix
            mp_ref[pl.ds(r0 + 1, TH), pl.ds(1, W), :] = (
                mid.reshape(TH, W, Cmid).astype(mp_ref.dtype))
            return c

        lax.fori_loop(0, n_tiles, mid_tile, 0)

        # ---- pass 2: row-tiled merged-head 3x3 conv, 3 K-concat matmuls/tile ----
        wh3 = [wh3_ref[kh] for kh in range(3)]  # 3 x (3*Cmid, Ntot), hoisted loads
        # bias-initialized accumulator, broadcast hoisted out of the tile loop
        bias_tile = jnp.broadcast_to(bh_ref[...], (TH * W, Ntot)).astype(jnp.float32)

        def conv_tile(t, c):
            r0 = t * TH
            acc = bias_tile
            for kh in range(3):
                rows = mp_ref[pl.ds(r0 + kh, TH)]                   # (TH, W+2, Cmid)
                # lane-dim concat of the 3 W-shifts -> one K=3*Cmid MXU dot
                patch = jnp.concatenate(
                    [rows[:, kw:kw + W, :] for kw in range(3)], axis=-1)
                acc = acc + jnp.dot(patch.reshape(TH * W, 3 * Cmid), wh3[kh],
                                    preferred_element_type=jnp.float32)

            # ---- epilogues on static lane slabs only ----
            a1 = acc[:, :n1]                                        # [key | sel]
            if need_e:
                a1 = jnp.concatenate(
                    [a1[:, :Kd], jax.nn.sigmoid(a1[:, Kd:])], axis=-1)
            ko_ref[0, pl.ds(r0, TH)] = a1.reshape(TH, W, n1).astype(ko_ref.dtype)
            if need_s:
                s = acc[:, n1:n1 + 1]
                so_ref[0, pl.ds(r0, TH)] = (
                    (s * s + 1.0).reshape(TH, W, 1).astype(so_ref.dtype))
            return c

        lax.fori_loop(0, n_tiles, conv_tile, 0)

    return kernel


# --------------------------- parameter packing ------------------------------ #

def pack_key_projection_params(params, *, need_s, need_e,
                               compute_dtype=jnp.bfloat16):
    """One-time packing of the merged-head weights (hoisted out of the hot path)."""
    Cmid = params["w_pix"].shape[1]
    Kd = params["w_key"].shape[-1]

    # channel layout of the merged matmul: [key | sel? | shr? | 0-pad]
    w_parts = [params["w_key"]]
    b_parts = [params["b_key"].reshape(-1)]
    if need_e:
        w_parts.append(params["w_e"])
        b_parts.append(params["b_e"].reshape(-1))
    if need_s:
        w_parts.append(params["w_d"])
        b_parts.append(params["b_d"].reshape(-1))
    w_h = jnp.concatenate(w_parts, axis=-1)                 # (3, 3, Cmid, n_used)
    b_h = jnp.concatenate(b_parts)
    n_used = w_h.shape[-1]
    n1 = Kd * (2 if need_e else 1)                          # lanes of the fused output
    Ntot = _round_up(n_used, 128)                           # MXU N / accumulator lanes
    w_h = jnp.pad(w_h, ((0, 0), (0, 0), (0, 0), (0, Ntot - n_used)))
    wh3 = w_h.reshape(3, 3 * Cmid, Ntot).astype(compute_dtype)   # K-concat layout
    bh = jnp.pad(b_h, (0, Ntot - n_used)).reshape(1, Ntot).astype(jnp.float32)

    return dict(
        w_pix=params["w_pix"].astype(compute_dtype),
        b_pix=params["b_pix"].astype(jnp.float32).reshape(1, Cmid),
        wh3=wh3,
        bh=bh,
        meta=dict(Kd=Kd, Cmid=Cmid, n1=n1, n_used=n_used, Ntot=Ntot,
                  need_s=need_s, need_e=need_e, compute_dtype=compute_dtype),
    )


# ------------------------------- wrapper ----------------------------------- #

def key_projection_forward(x_nchw, packed, *, row_tile=None):
    """Mirrors KeyProjection.forward. Returns (key, shrinkage|None, selection|None), NCHW."""
    meta = packed["meta"]
    need_s, need_e = meta["need_s"], meta["need_e"]
    Kd, Cmid, n1, Ntot = meta["Kd"], meta["Cmid"], meta["n1"], meta["Ntot"]
    compute_dtype = meta["compute_dtype"]

    x = jnp.transpose(x_nchw, (0, 2, 3, 1))                 # NCHW -> NHWC (stays f32)
    B, H, W, Cin = x.shape
    TH = row_tile if row_tile is not None else _pick_row_tile(H)
    assert H % TH == 0, "row tile must divide H"

    kernel = _make_fused_kernel(H=H, W=W, TH=TH, Kd=Kd, n1=n1, Ntot=Ntot,
                                need_s=need_s, need_e=need_e,
                                compute_dtype=compute_dtype)

    out_shape = [jax.ShapeDtypeStruct((B, H, W, n1), x_nchw.dtype)]
    out_specs = [pl.BlockSpec((1, H, W, n1), lambda bi: (bi, 0, 0, 0))]
    if need_s:
        out_shape.append(jax.ShapeDtypeStruct((B, H, W, 1), x_nchw.dtype))
        out_specs.append(pl.BlockSpec((1, H, W, 1), lambda bi: (bi, 0, 0, 0)))

    cp_kwargs = dict(dimension_semantics=("parallel",))
    vmem_limit = _vmem_limit_bytes()
    if vmem_limit is not None:
        cp_kwargs["vmem_limit_bytes"] = int(vmem_limit)

    outs = pl.pallas_call(
        kernel,
        out_shape=out_shape,
        grid_spec=pltpu.PrefetchScalarGridSpec(
            num_scalar_prefetch=0,
            grid=(B,),
            in_specs=[
                pl.BlockSpec((1, H, W, Cin), lambda bi: (bi, 0, 0, 0)),
                pl.BlockSpec((Cin, Cmid), lambda bi: (0, 0)),
                pl.BlockSpec((1, Cmid), lambda bi: (0, 0)),
                pl.BlockSpec((3, 3 * Cmid, Ntot), lambda bi: (0, 0, 0)),
                pl.BlockSpec((1, Ntot), lambda bi: (0, 0)),
            ],
            out_specs=out_specs,
            scratch_shapes=[pltpu.VMEM((H + 2, W + 2, Cmid), compute_dtype)],
        ),
        compiler_params=pltpu.CompilerParams(**cp_kwargs),
    )(x, packed["w_pix"], packed["b_pix"], packed["wh3"], packed["bh"])

    fused = outs[0]
    to_nchw = lambda t: jnp.transpose(t, (0, 3, 1, 2))
    key = to_nchw(fused[..., :Kd])
    selection = to_nchw(fused[..., Kd:]) if need_e else None
    shrinkage = to_nchw(outs[1]) if need_s else None
    return key, shrinkage, selection


# --------------------------- params & reference ---------------------------- #

def make_params(key, in_dim, mid_dim, key_dim):
    k1, k2, k3, k4, k5, k6, k7 = jax.random.split(key, 7)
    w_pix = jax.random.normal(k1, (in_dim, mid_dim), jnp.float32) * 0.1
    b_pix = jax.random.normal(k2, (1, mid_dim), jnp.float32) * 0.01
    a = jax.random.normal(k3, (mid_dim * 9, key_dim), jnp.float32)
    q, _ = jnp.linalg.qr(a)                               # orthonormal columns
    w_key_oihw = q.T.reshape(key_dim, mid_dim, 3, 3)      # PyTorch OIHW
    w_key = jnp.transpose(w_key_oihw, (2, 3, 1, 0))       # HWIO
    b_key = jnp.zeros((1, key_dim), jnp.float32)
    w_d = jax.random.normal(k4, (3, 3, mid_dim, 1), jnp.float32) * 0.05
    b_d = jax.random.normal(k5, (1, 1), jnp.float32) * 0.01
    w_e = jax.random.normal(k6, (3, 3, mid_dim, key_dim), jnp.float32) * 0.05
    b_e = jax.random.normal(k7, (1, key_dim), jnp.float32) * 0.01
    return dict(w_pix=w_pix, b_pix=b_pix, w_key=w_key, b_key=b_key,
                w_d=w_d, b_d=b_d, w_e=w_e, b_e=b_e)


def _conv_ref(x_nhwc, w_hwio, b):
    y = lax.conv_general_dilated(
        x_nhwc, w_hwio, window_strides=(1, 1),
        padding="SAME" if w_hwio.shape[0] == 3 else "VALID",
        dimension_numbers=("NHWC", "HWIO", "NHWC"),
        precision=lax.Precision.HIGHEST)
    return y + b.reshape(1, 1, 1, -1)


def reference_forward(x_nchw, params):
    x = jnp.transpose(x_nchw, (0, 2, 3, 1))
    mid = _conv_ref(x, params["w_pix"].reshape(1, 1, *params["w_pix"].shape),
                    params["b_pix"])
    key = _conv_ref(mid, params["w_key"], params["b_key"])
    d = _conv_ref(mid, params["w_d"], params["b_d"])
    e = _conv_ref(mid, params["w_e"], params["b_e"])
    to_nchw = lambda t: jnp.transpose(t, (0, 3, 1, 2))
    return to_nchw(key), to_nchw(d * d + 1.0), to_nchw(jax.nn.sigmoid(e))


# ---------------------------------- test ----------------------------------- #

if __name__ == "__main__":
    B, in_dim, H, W = 2, 8, 16, 16      # small stand-ins for ms_dims[0]
    mid_dim, key_dim = 32, 8            # small stand-ins for pixel_dim / key_dim

    root = jax.random.PRNGKey(0)
    kx, kp = jax.random.split(root)
    x = jax.random.normal(kx, (B, in_dim, H, W), jnp.float32)   # NCHW like PyTorch
    params = make_params(kp, in_dim, mid_dim, key_dim)

    key_r, shr_r, sel_r = reference_forward(x, params)

    # optimized bf16 path (f32 accumulation / epilogues); H=16, TH=8 -> 2 row tiles
    packed_bf16 = pack_key_projection_params(params, need_s=True, need_e=True)
    key, shrinkage, selection = key_projection_forward(x, packed_bf16)
    jax.block_until_ready((key, shrinkage, selection))
    assert jnp.allclose(key, key_r, rtol=2e-2, atol=2e-2)
    assert jnp.allclose(shrinkage, shr_r, rtol=2e-2, atol=2e-2)
    assert jnp.allclose(selection, sel_r, rtol=2e-2, atol=2e-2)

    # f32 path, tight tolerance (same algorithm, no bf16 quantization)
    packed_f32 = pack_key_projection_params(params, need_s=True, need_e=True,
                                            compute_dtype=jnp.float32)
    key32, shr32, sel32 = key_projection_forward(x, packed_f32)
    jax.block_until_ready((key32, shr32, sel32))
    assert jnp.allclose(key32, key_r, rtol=1e-3, atol=1e-3)
    assert jnp.allclose(shr32, shr_r, rtol=1e-3, atol=1e-3)
    assert jnp.allclose(sel32, sel_r, rtol=1e-3, atol=1e-3)

    # need_s / need_e = False: kernel is specialized (e/d heads never computed
    # nor written) and the wrapper returns None like the PyTorch module.
    packed_k = pack_key_projection_params(params, need_s=False, need_e=False)
    k2, s2, e2 = key_projection_forward(x, packed_k)
    jax.block_until_ready(k2)
    assert s2 is None and e2 is None
    assert jnp.allclose(k2, key_r, rtol=2e-2, atol=2e-2)

    print("KERNEL_OK")
</pallas_src>

<mosaic_0001>
module attributes {stable_mosaic.version = 11 : i64} {
  func.func @kernel(%arg0: i32, %arg1: memref<1x16x16x8xf32, #tpu.memory_space<vmem>>, %arg2: memref<8x32xbf16, #tpu.memory_space<vmem>>, %arg3: memref<1x32xf32, #tpu.memory_space<vmem>>, %arg4: memref<3x96x128xbf16, #tpu.memory_space<vmem>>, %arg5: memref<1x128xf32, #tpu.memory_space<vmem>>, %arg6: memref<1x16x16x16xf32, #tpu.memory_space<vmem>>, %arg7: memref<1x16x16x1xf32, #tpu.memory_space<vmem>>, %arg8: memref<18x18x32xbf16, #tpu.memory_space<vmem>>) attributes {dimension_semantics = [#tpu.dimension_semantics<parallel>], iteration_bounds = array<i64: 2>, scalar_prefetch = 0 : i64, scratch_operands = 1 : i64, tpu.core_type = #tpu.core_type<tc>, window_params = [{transform_indices = @transform_0, window_bounds = array<i64: 1, 16, 16, 8>}, {pipeline_mode = #tpu.pipeline_mode<synchronous>, transform_indices = @transform_1, window_bounds = array<i64: 8, 32>}, {pipeline_mode = #tpu.pipeline_mode<synchronous>, transform_indices = @transform_2, window_bounds = array<i64: 1, 32>}, {pipeline_mode = #tpu.pipeline_mode<synchronous>, transform_indices = @transform_3, window_bounds = array<i64: 3, 96, 128>}, {pipeline_mode = #tpu.pipeline_mode<synchronous>, transform_indices = @transform_4, window_bounds = array<i64: 1, 128>}, {transform_indices = @transform_5, window_bounds = array<i64: 1, 16, 16, 16>}, {transform_indices = @transform_6, window_bounds = array<i64: 1, 16, 16, 1>}]} {
    %cst = arith.constant 0.000000e+00 : bf16
    %0 = vector.broadcast %cst : bf16 to vector<1x18x32xbf16>
    %c0 = arith.constant 0 : index
    %c0_0 = arith.constant 0 : index
    %c0_1 = arith.constant 0 : index
    %1 = vector.load %arg8[%c0, %c0_0, %c0_1] : memref<18x18x32xbf16, #tpu.memory_space<vmem>>, vector<1x18x32xbf16>
    tpu.vector_store %arg8[%c0, %c0_0, %c0_1], %0 {strides = array<i32>} : memref<18x18x32xbf16, #tpu.memory_space<vmem>>, vector<1x18x32xbf16>,
    %cst_2 = arith.constant 0.000000e+00 : bf16
    %2 = vector.broadcast %cst_2 : bf16 to vector<1x18x32xbf16>
    %c17 = arith.constant 17 : index
    %c0_3 = arith.constant 0 : index
    %c0_4 = arith.constant 0 : index
    %3 = vector.load %arg8[%c17, %c0_3, %c0_4] : memref<18x18x32xbf16, #tpu.memory_space<vmem>>, vector<1x18x32xbf16>
    tpu.vector_store %arg8[%c17, %c0_3, %c0_4], %2 {strides = array<i32>} : memref<18x18x32xbf16, #tpu.memory_space<vmem>>, vector<1x18x32xbf16>,
    %cst_5 = arith.constant 0.000000e+00 : bf16
    %4 = vector.broadcast %cst_5 : bf16 to vector<18x1x32xbf16>
    %c0_6 = arith.constant 0 : index
    %c0_7 = arith.constant 0 : index
    %c0_8 = arith.constant 0 : index
    %5 = vector.load %arg8[%c0_6, %c0_7, %c0_8] : memref<18x18x32xbf16, #tpu.memory_space<vmem>>, vector<18x1x32xbf16>
    tpu.vector_store %arg8[%c0_6, %c0_7, %c0_8], %4 {strides = array<i32>} : memref<18x18x32xbf16, #tpu.memory_space<vmem>>, vector<18x1x32xbf16>,
    %cst_9 = arith.constant 0.000000e+00 : bf16
    %6 = vector.broadcast %cst_9 : bf16 to vector<18x1x32xbf16>
    %c0_10 = arith.constant 0 : index
    %c17_11 = arith.constant 17 : index
    %c0_12 = arith.constant 0 : index
    %7 = vector.load %arg8[%c0_10, %c17_11, %c0_12] : memref<18x18x32xbf16, #tpu.memory_space<vmem>>, vector<18x1x32xbf16>
    tpu.vector_store %arg8[%c0_10, %c17_11, %c0_12], %6 {strides = array<i32>} : memref<18x18x32xbf16, #tpu.memory_space<vmem>>, vector<18x1x32xbf16>,
    %c0_13 = arith.constant 0 : index
    %c0_14 = arith.constant 0 : index
    %8 = vector.load %arg2[%c0_13, %c0_14] : memref<8x32xbf16, #tpu.memory_space<vmem>>, vector<8x32xbf16>
    %c0_15 = arith.constant 0 : index
    %c0_16 = arith.constant 0 : index
    %9 = vector.load %arg3[%c0_15, %c0_16] : memref<1x32xf32, #tpu.memory_space<vmem>>, vector<1x32xf32>
    %c0_i32 = arith.constant 0 : i32
    %c2_i32 = arith.constant 2 : i32
    %10 = arith.addi %c0_i32, %c2_i32 : i32
    %c1_i32 = arith.constant 1 : i32
    scf.for %arg9 = %c0_i32 to %10 step %c1_i32  : i32 {
      %c8_i32 = arith.constant 8 : i32
      %21 = arith.muli %arg9, %c8_i32 : i32
      %c0_31 = arith.constant 0 : index
      %22 = arith.index_cast %21 : i32 to index
      %c0_32 = arith.constant 0 : index
      %c0_33 = arith.constant 0 : index
      %23 = vector.load %arg1[%c0_31, %22, %c0_32, %c0_33] : memref<1x16x16x8xf32, #tpu.memory_space<vmem>>, vector<1x8x16x8xf32>
      %24 = vector.shape_cast %23 : vector<1x8x16x8xf32> to vector<8x16x8xf32>
      %25 = arith.truncf %24 : vector<8x16x8xf32> to vector<8x16x8xbf16>
      %26 = vector.shape_cast %25 : vector<8x16x8xbf16> to vector<128x8xbf16>
      %cst_34 = arith.constant dense<0.000000e+00> : vector<128x32xf32>
      %27 = tpu.matmul %26, %8, %cst_34 {dimension_numbers = #tpu.dot_dimension_numbers<[1], [0], [0], [1], [0, 0, 1, 1], [], []>} : vector<128x8xbf16>, vector<8x32xbf16>, vector<128x32xf32> -> vector<128x32xf32>
      %28 = vector.broadcast %9 : vector<1x32xf32> to vector<128x32xf32>
      %29 = arith.addf %27, %28 : vector<128x32xf32>
      %30 = vector.shape_cast %29 : vector<128x32xf32> to vector<8x16x32xf32>
      %31 = arith.truncf %30 : vector<8x16x32xf32> to vector<8x16x32xbf16>
      %c1_i32_35 = arith.constant 1 : i32
      %32 = arith.addi %21, %c1_i32_35 : i32
      %33 = arith.index_cast %32 : i32 to index
      %c1_36 = arith.constant 1 : index
      %c0_37 = arith.constant 0 : index
      %34 = vector.load %arg8[%33, %c1_36, %c0_37] : memref<18x18x32xbf16, #tpu.memory_space<vmem>>, vector<8x16x32xbf16>
      tpu.vector_store %arg8[%33, %c1_36, %c0_37], %31 {strides = array<i32>} : memref<18x18x32xbf16, #tpu.memory_space<vmem>>, vector<8x16x32xbf16>,
    }
    %c2_i32_17 = arith.constant 2 : i32
    %c0_18 = arith.constant 0 : index
    %c0_19 = arith.constant 0 : index
    %c0_20 = arith.constant 0 : index
    %11 = vector.load %arg4[%c0_18, %c0_19, %c0_20] : memref<3x96x128xbf16, #tpu.memory_space<vmem>>, vector<1x96x128xbf16>
    %12 = vector.shape_cast %11 : vector<1x96x128xbf16> to vector<96x128xbf16>
    %c1 = arith.constant 1 : index
    %c0_21 = arith.constant 0 : index
    %c0_22 = arith.constant 0 : index
    %13 = vector.load %arg4[%c1, %c0_21, %c0_22] : memref<3x96x128xbf16, #tpu.memory_space<vmem>>, vector<1x96x128xbf16>
    %14 = vector.shape_cast %13 : vector<1x96x128xbf16> to vector<96x128xbf16>
    %c2 = arith.constant 2 : index
    %c0_23 = arith.constant 0 : index
    %c0_24 = arith.constant 0 : index
    %15 = vector.load %arg4[%c2, %c0_23, %c0_24] : memref<3x96x128xbf16, #tpu.memory_space<vmem>>, vector<1x96x128xbf16>
    %16 = vector.shape_cast %15 : vector<1x96x128xbf16> to vector<96x128xbf16>
    %c0_25 = arith.constant 0 : index
    %c0_26 = arith.constant 0 : index
    %17 = vector.load %arg5[%c0_25, %c0_26] : memref<1x128xf32, #tpu.memory_space<vmem>>, vector<1x128xf32>
    %18 = vector.shape_cast %17 : vector<1x128xf32> to vector<1x128xf32>
    %19 = vector.broadcast %18 : vector<1x128xf32> to vector<128x128xf32>
    %c0_i32_27 = arith.constant 0 : i32
    %c2_i32_28 = arith.constant 2 : i32
    %20 = arith.addi %c0_i32_27, %c2_i32_28 : i32
    %c1_i32_29 = arith.constant 1 : i32
    scf.for %arg9 = %c0_i32_27 to %20 step %c1_i32_29  : i32 {
      %c8_i32 = arith.constant 8 : i32
      %21 = arith.muli %arg9, %c8_i32 : i32
      %c0_i32_31 = arith.constant 0 : i32
      %22 = arith.addi %21, %c0_i32_31 : i32
      %23 = arith.index_cast %22 : i32 to index
      %c0_32 = arith.constant 0 : index
      %c0_33 = arith.constant 0 : index
      %24 = vector.load %arg8[%23, %c0_32, %c0_33] : memref<18x18x32xbf16, #tpu.memory_space<vmem>>, vector<8x18x32xbf16>
      %25 = vector.extract_strided_slice %24 {offsets = [0, 0, 0], sizes = [8, 16, 32], strides = [1, 1, 1]} : vector<8x18x32xbf16> to vector<8x16x32xbf16>
      %26 = vector.extract_strided_slice %24 {offsets = [0, 1, 0], sizes = [8, 16, 32], strides = [1, 1, 1]} : vector<8x18x32xbf16> to vector<8x16x32xbf16>
      %27 = vector.extract_strided_slice %24 {offsets = [0, 2, 0], sizes = [8, 16, 32], strides = [1, 1, 1]} : vector<8x18x32xbf16> to vector<8x16x32xbf16>
      %28 = tpu.concatenate %25, %26, %27 in 2 : vector<8x16x32xbf16>, vector<8x16x32xbf16>, vector<8x16x32xbf16> -> vector<8x16x96xbf16>
      %29 = vector.shape_cast %28 : vector<8x16x96xbf16> to vector<128x96xbf16>
      %cst_34 = arith.constant dense<0.000000e+00> : vector<128x128xf32>
      %30 = tpu.matmul %29, %12, %cst_34 {dimension_numbers = #tpu.dot_dimension_numbers<[1], [0], [0], [1], [0, 0, 1, 1], [], []>} : vector<128x96xbf16>, vector<96x128xbf16>, vector<128x128xf32> -> vector<128x128xf32>
      %31 = arith.addf %19, %30 : vector<128x128xf32>
      %c1_i32_35 = arith.constant 1 : i32
      %32 = arith.addi %21, %c1_i32_35 : i32
      %33 = arith.index_cast %32 : i32 to index
      %c0_36 = arith.constant 0 : index
      %c0_37 = arith.constant 0 : index
      %34 = vector.load %arg8[%33, %c0_36, %c0_37] : memref<18x18x32xbf16, #tpu.memory_space<vmem>>, vector<8x18x32xbf16>
      %35 = vector.extract_strided_slice %34 {offsets = [0, 0, 0], sizes = [8, 16, 32], strides = [1, 1, 1]} : vector<8x18x32xbf16> to vector<8x16x32xbf16>
      %36 = vector.extract_strided_slice %34 {offsets = [0, 1, 0], sizes = [8, 16, 32], strides = [1, 1, 1]} : vector<8x18x32xbf16> to vector<8x16x32xbf16>
      %37 = vector.extract_strided_slice %34 {offsets = [0, 2, 0], sizes = [8, 16, 32], strides = [1, 1, 1]} : vector<8x18x32xbf16> to vector<8x16x32xbf16>
      %38 = tpu.concatenate %35, %36, %37 in 2 : vector<8x16x32xbf16>, vector<8x16x32xbf16>, vector<8x16x32xbf16> -> vector<8x16x96xbf16>
      %39 = vector.shape_cast %38 : vector<8x16x96xbf16> to vector<128x96xbf16>
      %cst_38 = arith.constant dense<0.000000e+00> : vector<128x128xf32>
      %40 = tpu.matmul %39, %14, %cst_38 {dimension_numbers = #tpu.dot_dimension_numbers<[1], [0], [0], [1], [0, 0, 1, 1], [], []>} : vector<128x96xbf16>, vector<96x128xbf16>, vector<128x128xf32> -> vector<128x128xf32>
      %41 = arith.addf %31, %40 : vector<128x128xf32>
      %c2_i32_39 = arith.constant 2 : i32
      %42 = arith.addi %21, %c2_i32_39 : i32
      %43 = arith.index_cast %42 : i32 to index
      %c0_40 = arith.constant 0 : index
      %c0_41 = arith.constant 0 : index
      %44 = vector.load %arg8[%43, %c0_40, %c0_41] : memref<18x18x32xbf16, #tpu.memory_space<vmem>>, vector<8x18x32xbf16>
      %45 = vector.extract_strided_slice %44 {offsets = [0, 0, 0], sizes = [8, 16, 32], strides = [1, 1, 1]} : vector<8x18x32xbf16> to vector<8x16x32xbf16>
      %46 = vector.extract_strided_slice %44 {offsets = [0, 1, 0], sizes = [8, 16, 32], strides = [1, 1, 1]} : vector<8x18x32xbf16> to vector<8x16x32xbf16>
      %47 = vector.extract_strided_slice %44 {offsets = [0, 2, 0], sizes = [8, 16, 32], strides = [1, 1, 1]} : vector<8x18x32xbf16> to vector<8x16x32xbf16>
      %48 = tpu.concatenate %45, %46, %47 in 2 : vector<8x16x32xbf16>, vector<8x16x32xbf16>, vector<8x16x32xbf16> -> vector<8x16x96xbf16>
      %49 = vector.shape_cast %48 : vector<8x16x96xbf16> to vector<128x96xbf16>
      %cst_42 = arith.constant dense<0.000000e+00> : vector<128x128xf32>
      %50 = tpu.matmul %49, %16, %cst_42 {dimension_numbers = #tpu.dot_dimension_numbers<[1], [0], [0], [1], [0, 0, 1, 1], [], []>} : vector<128x96xbf16>, vector<96x128xbf16>, vector<128x128xf32> -> vector<128x128xf32>
      %51 = arith.addf %41, %50 : vector<128x128xf32>
      %52 = vector.extract_strided_slice %51 {offsets = [0, 0], sizes = [128, 16], strides = [1, 1]} : vector<128x128xf32> to vector<128x16xf32>
      %53 = vector.extract_strided_slice %52 {offsets = [0, 0], sizes = [128, 8], strides = [1, 1]} : vector<128x16xf32> to vector<128x8xf32>
      %54 = vector.extract_strided_slice %52 {offsets = [0, 8], sizes = [128, 8], strides = [1, 1]} : vector<128x16xf32> to vector<128x8xf32>
      %55 = arith.negf %54 : vector<128x8xf32>
      %56 = math.exp %55 : vector<128x8xf32>
      %cst_43 = arith.constant 1.000000e+00 : f32
      %57 = vector.broadcast %cst_43 : f32 to vector<128x8xf32>
      %58 = arith.addf %57, %56 : vector<128x8xf32>
      %59 = arith.divf %57, %58 : vector<128x8xf32>
      %60 = tpu.concatenate %53, %59 in 1 : vector<128x8xf32>, vector<128x8xf32> -> vector<128x16xf32>
      %61 = vector.shape_cast %60 : vector<128x16xf32> to vector<8x16x16xf32>
      %c0_44 = arith.constant 0 : index
      %62 = arith.index_cast %21 : i32 to index
      %c0_45 = arith.constant 0 : index
      %c0_46 = arith.constant 0 : index
      %63 = vector.load %arg6[%c0_44, %62, %c0_45, %c0_46] : memref<1x16x16x16xf32, #tpu.memory_space<vmem>>, vector<1x8x16x16xf32>
      %64 = vector.shape_cast %63 : vector<1x8x16x16xf32> to vector<8x16x16xf32>
      %65 = vector.shape_cast %61 : vector<8x16x16xf32> to vector<1x8x16x16xf32>
      tpu.vector_store %arg6[%c0_44, %62, %c0_45, %c0_46], %65 {strides = array<i32>} : memref<1x16x16x16xf32, #tpu.memory_space<vmem>>, vector<1x8x16x16xf32>,
      %66 = vector.extract_strided_slice %51 {offsets = [0, 16], sizes = [128, 1], strides = [1, 1]} : vector<128x128xf32> to vector<128x1xf32>
      %67 = arith.mulf %66, %66 : vector<128x1xf32>
      %cst_47 = arith.constant 1.000000e+00 : f32
      %68 = vector.broadcast %cst_47 : f32 to vector<128x1xf32>
      %69 = arith.addf %67, %68 : vector<128x1xf32>
      %70 = vector.shape_cast %69 : vector<128x1xf32> to vector<8x16x1xf32>
      %c0_48 = arith.constant 0 : index
      %71 = arith.index_cast %21 : i32 to index
      %c0_49 = arith.constant 0 : index
      %c0_50 = arith.constant 0 : index
      %72 = vector.load %arg7[%c0_48, %71, %c0_49, %c0_50] : memref<1x16x16x1xf32, #tpu.memory_space<vmem>>, vector<1x8x16x1xf32>
      %73 = vector.shape_cast %72 : vector<1x8x16x1xf32> to vector<8x16x1xf32>
      %74 = vector.shape_cast %70 : vector<8x16x1xf32> to vector<1x8x16x1xf32>
      tpu.vector_store %arg7[%c0_48, %71, %c0_49, %c0_50], %74 {strides = array<i32>} : memref<1x16x16x1xf32, #tpu.memory_space<vmem>>, vector<1x8x16x1xf32>,
    }
    %c2_i32_30 = arith.constant 2 : i32
    return
  }
  func.func @transform_0(%arg0: i32) -> (i32, i32, i32, i32) {
    %c0_i32 = arith.constant 0 : i32
    %c0_i32_0 = arith.constant 0 : i32
    %c0_i32_1 = arith.constant 0 : i32
    %c0_i32_2 = arith.constant 0 : i32
    return %arg0, %c0_i32, %c0_i32_0, %c0_i32_1 : i32, i32, i32, i32
  }
  func.func @transform_1(%arg0: i32) -> (i32, i32) {
    %c0_i32 = arith.constant 0 : i32
    %c0_i32_0 = arith.constant 0 : i32
    %c0_i32_1 = arith.constant 0 : i32
    return %c0_i32, %c0_i32_0 : i32, i32
  }
  func.func @transform_2(%arg0: i32) -> (i32, i32) {
    %c0_i32 = arith.constant 0 : i32
    %c0_i32_0 = arith.constant 0 : i32
    %c0_i32_1 = arith.constant 0 : i32
    return %c0_i32, %c0_i32_0 : i32, i32
  }
  func.func @transform_3(%arg0: i32) -> (i32, i32, i32) {
    %c0_i32 = arith.constant 0 : i32
    %c0_i32_0 = arith.constant 0 : i32
    %c0_i32_1 = arith.constant 0 : i32
    %c0_i32_2 = arith.constant 0 : i32
    return %c0_i32, %c0_i32_0, %c0_i32_1 : i32, i32, i32
  }
  func.func @transform_4(%arg0: i32) -> (i32, i32) {
    %c0_i32 = arith.constant 0 : i32
    %c0_i32_0 = arith.constant 0 : i32
    %c0_i32_1 = arith.constant 0 : i32
    return %c0_i32, %c0_i32_0 : i32, i32
  }
  func.func @transform_5(%arg0: i32) -> (i32, i32, i32, i32) {
    %c0_i32 = arith.constant 0 : i32
    %c0_i32_0 = arith.constant 0 : i32
    %c0_i32_1 = arith.constant 0 : i32
    %c0_i32_2 = arith.constant 0 : i32
    return %arg0, %c0_i32, %c0_i32_0, %c0_i32_1 : i32, i32, i32, i32
  }
  func.func @transform_6(%arg0: i32) -> (i32, i32, i32, i32) {
    %c0_i32 = arith.constant 0 : i32
    %c0_i32_0 = arith.constant 0 : i32
    %c0_i32_1 = arith.constant 0 : i32
    %c0_i32_2 = arith.constant 0 : i32
    return %arg0, %c0_i32, %c0_i32_0, %c0_i32_1 : i32, i32, i32, i32
  }
}

</mosaic_0001>

<llo_original>
// kernel: tpu_custom_call.1
$region0: #{tpu_custom_call.1}
  #allocation0 [shape = 'u32[]', space=smem, size = 0x4, offset = 0x4, fixed_abs, tag = 'smem constant byte address 0x4 - core index']
  #allocation1 [shape = 'u32[144,128]{1,0:T(1,128)}', space=vmem, size = 0x12000, scoped, tag = 'internal scratch']
  #allocation2 [shape = 'bf16[18,18,32]{2,1,0:T(8,128)(2,1)}', space=vmem, size = 0x1b000, scoped, tag = 'scratch operand']
  %s0 = inlined_call_operand.vmem [shape: f32[2,16,16,8], index: 0, kind: input, shape index: {}]
  %s1 = inlined_call_operand.vmem [shape: bf16[8,32], index: 1, kind: input, shape index: {}]
  %s2 = inlined_call_operand.vmem [shape: f32[1,32], index: 2, kind: input, shape index: {}]
  %s3 = inlined_call_operand.vmem [shape: bf16[3,96,128], index: 3, kind: input, shape index: {}]
  %s4 = inlined_call_operand.vmem [shape: f32[1,128], index: 4, kind: input, shape index: {}]
  %s5 = inlined_call_operand.hbm [shape: f32[2,16,16,16], index: 5, kind: output, shape index: {0}]
  %s6 = inlined_call_operand.vmem [shape: f32[2,16,16,1], index: 6, kind: output, shape index: {1}]
  %7 = xla_tuple %s5, %s6
  %s8 = sld [smem:[#allocation0]]
  $region75: #{tpu_custom_call.1} parent=0
    _
  %s10 = ssub.s32 1, %s8
  %s11 = scalar_select 0, %s10, %s8
  $region1: #{tpu_custom_call.1} parent=0
    #allocation3 [shape = 'u8[262144]{0}', space=vmem, size = 0x40000, scoped, tag = 'output window, operand 0']
    #allocation4 [shape = 's32[2]{0}', space=sflag, size = 0x8, scoped, tag = 'scoped memory for tpu_custom_call.1']
    %12 = vsyncpa [#allocation4], 0
    %s13 = scalar_lea.sflag [#allocation4], 1
    %14 = vsyncpa %s13, 0
    loop: start=0, step=1, limit=4
    $region2: #{tpu_custom_call.1} parent=1 // loop_pre_header
      _
    $region3: #{tpu_custom_call.1} parent=1 // loop_header
      %s16 = sphi 0, %s20
      %p17 = scmp.ge.s32.totalorder %s16, 4
      %s26 = sphi 0, %s28
      %s29 = sphi 0, %s26
      %s30 = sphi 0, %s29
      %s46 = sphi 0, %s30
      %s50 = sphi 0, %s50
      %s52 = sphi 0, %s50
      %s53 = sphi 0, %s52
      %s67 = sphi 0, %s53
      %s71 = sphi 0, %s71
      %s73 = sphi 0, %s71
      %s74 = sphi 0, %s73
      %s88 = sphi 0, %s74
      %s92 = sphi 0, %s92
      %s94 = sphi 0, %s92
      %s95 = sphi 0, %s94
      %s109 = sphi 0, %s95
      %s113 = sphi 0, %s113
      %s115 = sphi 0, %s113
      %s116 = sphi 0, %s115
      %s130 = sphi 0, %s116
      %s136 = sphi 0, %s138
      %s139 = sphi 0, %s136
      %s140 = sphi 0, %s139
      %s156 = sphi 0, %s140
      %s162 = sphi 0, %s164
      %s165 = sphi 0, %s162
      %s166 = sphi 0, %s165
      %s182 = sphi 0, %s166
    $region4: #{tpu_custom_call.1} parent=1 // loop_header_branch
      %19 = sbr.rel (%p17) target = $region8
    $region5: #{tpu_custom_call.1} parent=1 // loop_body
      %s21 = ssub.s32 %s16, 1
      %s22 = ssub.s32 %s16, 2
      %s23 = sadd.s32 %s16, 1
      %s24 = ssub.s32 %s16, %s23
      %p25 = scmp.eq.s32.totalorder %s24, 0
      %s27 = sadd.s32 %s26, 1
      %s28 = scalar_select %p25, %s26, %s27
      %p31 = pneg %p25
      %p32 = scmp.eq.s32.totalorder %s16, 1
      %p33 = por %p31, %p32
      %p34 = scmp.ne.s32.totalorder %s26, %s29
      %p35 = scmp.eq.s32.totalorder %s16, 0
      %p36 = por %p34, %p35
      %p37 = scmp.ne.s32.totalorder %s26, %s29
      %p38 = scmp.eq.s32.totalorder %s21, 1
      %p39 = por %p37, %p38
      %p40 = scmp.ne.s32.totalorder %s29, %s30
      %p41 = scmp.eq.s32.totalorder %s21, 0
      %p42 = por %p40, %p41
      %p43 = scmp.ne.s32.totalorder %s29, %s30
      %p44 = scmp.eq.s32.totalorder %s22, 1
      %p45 = por %p43, %p44
      %p47 = scmp.ne.s32.totalorder %s30, %s46
      %p48 = scmp.eq.s32.totalorder %s22, 0
      %p49 = por %p47, %p48
      %s51 = sadd.s32 %s50, 1
      %p54 = scmp.eq.s32.totalorder %s16, 1
      %p55 = scmp.ne.s32.totalorder %s50, %s52
      %p56 = scmp.eq.s32.totalorder %s16, 0
      %p57 = por %p55, %p56
      %p58 = scmp.ne.s32.totalorder %s50, %s52
      %p59 = scmp.eq.s32.totalorder %s21, 1
      %p60 = por %p58, %p59
      %p61 = scmp.ne.s32.totalorder %s52, %s53
      %p62 = scmp.eq.s32.totalorder %s21, 0
      %p63 = por %p61, %p62
      %p64 = scmp.ne.s32.totalorder %s52, %s53
      %p65 = scmp.eq.s32.totalorder %s22, 1
      %p66 = por %p64, %p65
      %p68 = scmp.ne.s32.totalorder %s53, %s67
      %p69 = scmp.eq.s32.totalorder %s22, 0
      %p70 = por %p68, %p69
      %s72 = sadd.s32 %s71, 1
      %p75 = scmp.eq.s32.totalorder %s16, 1
      %p76 = scmp.ne.s32.totalorder %s71, %s73
      %p77 = scmp.eq.s32.totalorder %s16, 0
      %p78 = por %p76, %p77
      %p79 = scmp.ne.s32.totalorder %s71, %s73
      %p80 = scmp.eq.s32.totalorder %s21, 1
      %p81 = por %p79, %p80
      %p82 = scmp.ne.s32.totalorder %s73, %s74
      %p83 = scmp.eq.s32.totalorder %s21, 0
      %p84 = por %p82, %p83
      %p85 = scmp.ne.s32.totalorder %s73, %s74
      %p86 = scmp.eq.s32.totalorder %s22, 1
      %p87 = por %p85, %p86
      %p89 = scmp.ne.s32.totalorder %s74, %s88
      %p90 = scmp.eq.s32.totalorder %s22, 0
      %p91 = por %p89, %p90
      %s93 = sadd.s32 %s92, 1
      %p96 = scmp.eq.s32.totalorder %s16, 1
      %p97 = scmp.ne.s32.totalorder %s92, %s94
      %p98 = scmp.eq.s32.totalorder %s16, 0
      %p99 = por %p97, %p98
      %p100 = scmp.ne.s32.totalorder %s92, %s94
      %p101 = scmp.eq.s32.totalorder %s21, 1
      %p102 = por %p100, %p101
      %p103 = scmp.ne.s32.totalorder %s94, %s95
      %p104 = scmp.eq.s32.totalorder %s21, 0
      %p105 = por %p103, %p104
      %p106 = scmp.ne.s32.totalorder %s94, %s95
      %p107 = scmp.eq.s32.totalorder %s22, 1
      %p108 = por %p106, %p107
      %p110 = scmp.ne.s32.totalorder %s95, %s109
      %p111 = scmp.eq.s32.totalorder %s22, 0
      %p112 = por %p110, %p111
      %s114 = sadd.s32 %s113, 1
      %p117 = scmp.eq.s32.totalorder %s16, 1
      %p118 = scmp.ne.s32.totalorder %s113, %s115
      %p119 = scmp.eq.s32.totalorder %s16, 0
      %p120 = por %p118, %p119
      %p121 = scmp.ne.s32.totalorder %s113, %s115
      %p122 = scmp.eq.s32.totalorder %s21, 1
      %p123 = por %p121, %p122
      %p124 = scmp.ne.s32.totalorder %s115, %s116
      %p125 = scmp.eq.s32.totalorder %s21, 0
      %p126 = por %p124, %p125
      %p127 = scmp.ne.s32.totalorder %s115, %s116
      %p128 = scmp.eq.s32.totalorder %s22, 1
      %p129 = por %p127, %p128
      %p131 = scmp.ne.s32.totalorder %s116, %s130
      %p132 = scmp.eq.s32.totalorder %s22, 0
      %p133 = por %p131, %p132
      %s134 = ssub.s32 %s16, %s23
      %p135 = scmp.eq.s32.totalorder %s134, 0
      %s137 = sadd.s32 %s136, 1
      %s138 = scalar_select %p135, %s136, %s137
      %p141 = pneg %p135
      %p142 = scmp.eq.s32.totalorder %s16, 1
      %p143 = por %p141, %p142
      %p144 = scmp.ne.s32.totalorder %s136, %s139
      %p145 = scmp.eq.s32.totalorder %s16, 0
      %p146 = por %p144, %p145
      %p147 = scmp.ne.s32.totalorder %s136, %s139
      %p148 = scmp.eq.s32.totalorder %s21, 1
      %p149 = por %p147, %p148
      %p150 = scmp.ne.s32.totalorder %s139, %s140
      %p151 = scmp.eq.s32.totalorder %s21, 0
      %p152 = por %p150, %p151
      %p153 = scmp.ne.s32.totalorder %s139, %s140
      %p154 = scmp.eq.s32.totalorder %s22, 1
      %p155 = por %p153, %p154
      %p157 = scmp.ne.s32.totalorder %s140, %s156
      %p158 = scmp.eq.s32.totalorder %s22, 0
      %p159 = por %p157, %p158
      %s160 = ssub.s32 %s16, %s23
      %p161 = scmp.eq.s32.totalorder %s160, 0
      %s163 = sadd.s32 %s162, 1
      %s164 = scalar_select %p161, %s162, %s163
      %p167 = pneg %p161
      %p168 = scmp.eq.s32.totalorder %s16, 1
      %p169 = por %p167, %p168
      %p170 = scmp.ne.s32.totalorder %s162, %s165
      %p171 = scmp.eq.s32.totalorder %s16, 0
      %p172 = por %p170, %p171
      %p173 = scmp.ne.s32.totalorder %s162, %s165
      %p174 = scmp.eq.s32.totalorder %s21, 1
      %p175 = por %p173, %p174
      %p176 = scmp.ne.s32.totalorder %s165, %s166
      %p177 = scmp.eq.s32.totalorder %s21, 0
      %p178 = por %p176, %p177
      %p179 = scmp.ne.s32.totalorder %s165, %s166
      %p180 = scmp.eq.s32.totalorder %s22, 1
      %p181 = por %p179, %p180
      %p183 = scmp.ne.s32.totalorder %s166, %s182
      %p184 = scmp.eq.s32.totalorder %s22, 0
      %p185 = por %p183, %p184
      %p186 = scmp.le.s32.totalorder 1, %s16
      %p187 = scmp.lt.s32.totalorder %s16, 3
      %p188 = pnand %p186, %p187
      %p189 = pneg %p188
      // Predicated region
      $region9: #{tpu_custom_call.1} parent=5 // pred_check
        _
      $region10: #{tpu_custom_call.1} parent=5 // pred_check_branch
        %191 = sbr.rel (%p188) target = $region12
      $region11: #{tpu_custom_call.1} parent=5 // pred_region
        %s192 = ssub.s32 %s16, 1
        // Predicated region
        $region13: #{tpu_custom_call.1} parent=11 // pred_check
          %p193 = pneg %p63
        $region14: #{tpu_custom_call.1} parent=11 // pred_check_branch
          %195 = sbr.rel (%p193) target = $region16
        $region15: #{tpu_custom_call.1} parent=11 // pred_region
          _
        $region16: #{tpu_custom_call.1} parent=11 // pred_fallthru
          _
        // Predicated region
        $region17: #{tpu_custom_call.1} parent=11 // pred_check
          %p196 = pneg %p84
        $region18: #{tpu_custom_call.1} parent=11 // pred_check_branch
          %198 = sbr.rel (%p196) target = $region20
        $region19: #{tpu_custom_call.1} parent=11 // pred_region
          _
        $region20: #{tpu_custom_call.1} parent=11 // pred_fallthru
          _
        // Predicated region
        $region21: #{tpu_custom_call.1} parent=11 // pred_check
          %p199 = pneg %p105
        $region22: #{tpu_custom_call.1} parent=11 // pred_check_branch
          %201 = sbr.rel (%p199) target = $region24
        $region23: #{tpu_custom_call.1} parent=11 // pred_region
          _
        $region24: #{tpu_custom_call.1} parent=11 // pred_fallthru
          _
        // Predicated region
        $region25: #{tpu_custom_call.1} parent=11 // pred_check
          %p202 = pneg %p126
        $region26: #{tpu_custom_call.1} parent=11 // pred_check_branch
          %204 = sbr.rel (%p202) target = $region28
        $region27: #{tpu_custom_call.1} parent=11 // pred_region
          _
        $region28: #{tpu_custom_call.1} parent=11 // pred_fallthru
          _
      $region12: #{tpu_custom_call.1} parent=5 // pred_fallthru
        _
      %p205 = scmp.lt.s32.totalorder %s16, 2
      // Predicated region
      $region29: #{tpu_custom_call.1} parent=5 // pred_check
        %p206 = pneg %p205
      $region30: #{tpu_custom_call.1} parent=5 // pred_check_branch
        %208 = sbr.rel (%p206) target = $region32
      $region31: #{tpu_custom_call.1} parent=5 // pred_region
        // Predicated region
        $region33: #{tpu_custom_call.1} parent=31 // pred_check
          %p209 = pneg %p36
        $region34: #{tpu_custom_call.1} parent=31 // pred_check_branch
          %211 = sbr.rel (%p209) target = $region36
        $region35: #{tpu_custom_call.1} parent=31 // pred_region
          %p212 = scmp.lt.s32.totalorder %s16, 1
          %s213 = scalar_select %p212, %s16, 1
          %s214 = smul.addr %s213, 32
          %s215 = smul.addr %s214, 8
          %s216 = scalar_lea.vmem %s0, %s215
        $region36: #{tpu_custom_call.1} parent=31 // pred_fallthru
          _
      $region32: #{tpu_custom_call.1} parent=5 // pred_fallthru
        _
      %p217 = scmp.le.s32.totalorder 1, %s16
      %p218 = scmp.lt.s32.totalorder %s16, 3
      %p219 = pnand %p217, %p218
      %p220 = pneg %p219
      // Predicated region
      $region37: #{tpu_custom_call.1} parent=5 // pred_check
        _
      $region38: #{tpu_custom_call.1} parent=5 // pred_check_branch
        %222 = sbr.rel (%p219) target = $region40
      $region39: #{tpu_custom_call.1} parent=5 // pred_region
        %s223 = ssub.s32 %s16, 1
        %p224 = scmp.lt.s32.totalorder %s21, 1
        %s225 = scalar_select %p224, %s21, 1
        %s226 = smul.addr %s225, 32
        %s227 = smul.addr %s226, 8
        %s228 = scalar_lea.vmem %s0, %s227
        %p229 = pneg %p42
        %p230 = pneg %p39
        %p231 = pneg %p63
        %p232 = pneg %p60
        %p233 = pneg %p84
        %p234 = pneg %p81
        %p235 = pneg %p105
        %p236 = pneg %p102
        %p237 = pneg %p126
        %p238 = pneg %p123
        %p239 = pneg %p152
        %p240 = pneg %p149
        %s241 = sand.u32 %s139, 1
        %s242 = scalar_lea.sflag [#allocation4], %s241
        %s243 = sand.u32 %s139, 1
        %s244 = smul.addr %s243, 256
        %s245 = scalar_lea.vmem [#allocation3], %s244
        %p246 = pneg %p178
        %p247 = pneg %p175
        %p248 = scmp.lt.s32.totalorder %s21, 1
        %s249 = scalar_select %p248, %s21, 1
        %s250 = smul.addr %s249, 32
        %s251 = smul.addr %s250, 8
        %s252 = scalar_lea.vmem %s6, %s251
        %p253 = scmp.lt.s32.totalorder %s21, 1
        %s254 = scalar_select %p253, %s21, 1
        %s255 = smul.addr %s254, 32
        %s256 = smul.addr %s255, 8
        %s257 = scalar_lea.vmem %s0, %s256
        %p258 = scmp.lt.s32.totalorder %s21, 1
        %s259 = scalar_select %p258, %s21, 1
        %s260 = smul.addr %s259, 32
        %s261 = smul.addr %s260, 8
        %s262 = scalar_lea.vmem %s6, %s261
        %vm264 = vcmask 257024
        %265 = vst.msk [vmem:[#allocation2] sm:$0xf] %vm264, 0
        %266 = vst.msk [vmem:[#allocation2 + $0x4] sm:$0xf] %vm264, 0
        %vm267 = vcmask 253952
        %268 = vst.msk [vmem:[#allocation2 + $0x8] sm:$0x1] %vm267, 0
        %s269 = scalar_lea.vmem [#allocation2], 204
        %270 = vst.msk [vmem:[%s269] sm:$0xf] %vm264, 0
        %271 = vst.msk [vmem:[%s269 + $0x4] sm:$0xf] %vm264, 0
        %272 = vst.msk [vmem:[%s269 + $0x8] sm:$0x1] %vm267, 0
        %vm273 = vcmask 253952
        %vm274 = vsmask.f32 256
        %vm275 = vmand %vm273, %vm274
        %v276 = vld [vmem:[#allocation2] sm:$0x1]
        %v277 = vsel %vm275, 0, %v276
        %278 = vst [vmem:[#allocation2] sm:$0x1] %v277
        %v279 = vld [vmem:[#allocation2 + $0xc] sm:$0x1]
        %v280 = vsel %vm275, 0, %v279
        %281 = vst [vmem:[#allocation2 + $0xc] sm:$0x1] %v280
        %v282 = vld [vmem:[#allocation2 + $0x18] sm:$0x1]
        %v283 = vsel %vm275, 0, %v282
        %284 = vst [vmem:[#allocation2 + $0x18] sm:$0x1] %v283
        %v285 = vld [vmem:[#allocation2 + $0x24] sm:$0x1]
        %v286 = vsel %vm275, 0, %v285
        %287 = vst [vmem:[#allocation2 + $0x24] sm:$0x1] %v286
        %v288 = vld [vmem:[#allocation2 + $0x30] sm:$0x1]
        %v289 = vsel %vm275, 0, %v288
        %290 = vst [vmem:[#allocation2 + $0x30] sm:$0x1] %v289
        %v291 = vld [vmem:[#allocation2 + $0x3c] sm:$0x1]
        %v292 = vsel %vm275, 0, %v291
        %293 = vst [vmem:[#allocation2 + $0x3c] sm:$0x1] %v292
        %v294 = vld [vmem:[#allocation2 + $0x48] sm:$0x1]
        %v295 = vsel %vm275, 0, %v294
        %296 = vst [vmem:[#allocation2 + $0x48] sm:$0x1] %v295
        %v297 = vld [vmem:[#allocation2 + $0x54] sm:$0x1]
        %v298 = vsel %vm275, 0, %v297
        %299 = vst [vmem:[#allocation2 + $0x54] sm:$0x1] %v298
        %v300 = vld [vmem:[#allocation2 + $0x60] sm:$0x1]
        %v301 = vsel %vm275, 0, %v300
        %302 = vst [vmem:[#allocation2 + $0x60] sm:$0x1] %v301
        %v303 = vld [vmem:[#allocation2 + $0x6c] sm:$0x1]
        %v304 = vsel %vm275, 0, %v303
        %305 = vst [vmem:[#allocation2 + $0x6c] sm:$0x1] %v304
        %v306 = vld [vmem:[#allocation2 + $0x78] sm:$0x1]
        %v307 = vsel %vm275, 0, %v306
        %308 = vst [vmem:[#allocation2 + $0x78] sm:$0x1] %v307
        %v309 = vld [vmem:[#allocation2 + $0x84] sm:$0x1]
        %v310 = vsel %vm275, 0, %v309
        %311 = vst [vmem:[#allocation2 + $0x84] sm:$0x1] %v310
        %v312 = vld [vmem:[#allocation2 + $0x90] sm:$0x1]
        %v313 = vsel %vm275, 0, %v312
        %314 = vst [vmem:[#allocation2 + $0x90] sm:$0x1] %v313
        %v315 = vld [vmem:[#allocation2 + $0x9c] sm:$0x1]
        %v316 = vsel %vm275, 0, %v315
        %317 = vst [vmem:[#allocation2 + $0x9c] sm:$0x1] %v316
        %v318 = vld [vmem:[#allocation2 + $0xa8] sm:$0x1]
        %v319 = vsel %vm275, 0, %v318
        %320 = vst [vmem:[#allocation2 + $0xa8] sm:$0x1] %v319
        %v321 = vld [vmem:[#allocation2 + $0xb4] sm:$0x1]
        %v322 = vsel %vm275, 0, %v321
        %323 = vst [vmem:[#allocation2 + $0xb4] sm:$0x1] %v322
        %v324 = vld [vmem:[#allocation2 + $0xc0] sm:$0x1]
        %v325 = vsel %vm275, 0, %v324
        %326 = vst [vmem:[#allocation2 + $0xc0] sm:$0x1] %v325
        %v327 = vld [vmem:[#allocation2 + $0xcc] sm:$0x1]
        %v328 = vsel %vm275, 0, %v327
        %329 = vst [vmem:[#allocation2 + $0xcc] sm:$0x1] %v328
        %vm330 = vsmask.f32 7938
        %vm331 = vmand %vm273, %vm330
        %v332 = vld [vmem:[#allocation2 + $0x8] sm:$0x1]
        %v333 = vsel %vm331, 0, %v332
        %334 = vst [vmem:[#allocation2 + $0x8] sm:$0x1] %v333
        %v335 = vld [vmem:[#allocation2 + $0x14] sm:$0x1]
        %v336 = vsel %vm331, 0, %v335
        %337 = vst [vmem:[#allocation2 + $0x14] sm:$0x1] %v336
        %v338 = vld [vmem:[#allocation2 + $0x20] sm:$0x1]
        %v339 = vsel %vm331, 0, %v338
        %340 = vst [vmem:[#allocation2 + $0x20] sm:$0x1] %v339
        %v341 = vld [vmem:[#allocation2 + $0x2c] sm:$0x1]
        %v342 = vsel %vm331, 0, %v341
        %343 = vst [vmem:[#allocation2 + $0x2c] sm:$0x1] %v342
        %v344 = vld [vmem:[#allocation2 + $0x38] sm:$0x1]
        %v345 = vsel %vm331, 0, %v344
        %346 = vst [vmem:[#allocation2 + $0x38] sm:$0x1] %v345
        %v347 = vld [vmem:[#allocation2 + $0x44] sm:$0x1]
        %v348 = vsel %vm331, 0, %v347
        %349 = vst [vmem:[#allocation2 + $0x44] sm:$0x1] %v348
        %v350 = vld [vmem:[#allocation2 + $0x50] sm:$0x1]
        %v351 = vsel %vm331, 0, %v350
        %352 = vst [vmem:[#allocation2 + $0x50] sm:$0x1] %v351
        %v353 = vld [vmem:[#allocation2 + $0x5c] sm:$0x1]
        %v354 = vsel %vm331, 0, %v353
        %355 = vst [vmem:[#allocation2 + $0x5c] sm:$0x1] %v354
        %v356 = vld [vmem:[#allocation2 + $0x68] sm:$0x1]
        %v357 = vsel %vm331, 0, %v356
        %358 = vst [vmem:[#allocation2 + $0x68] sm:$0x1] %v357
        %v359 = vld [vmem:[#allocation2 + $0x74] sm:$0x1]
        %v360 = vsel %vm331, 0, %v359
        %361 = vst [vmem:[#allocation2 + $0x74] sm:$0x1] %v360
        %v362 = vld [vmem:[#allocation2 + $0x80] sm:$0x1]
        %v363 = vsel %vm331, 0, %v362
        %364 = vst [vmem:[#allocation2 + $0x80] sm:$0x1] %v363
        %v365 = vld [vmem:[#allocation2 + $0x8c] sm:$0x1]
        %v366 = vsel %vm331, 0, %v365
        %367 = vst [vmem:[#allocation2 + $0x8c] sm:$0x1] %v366
        %v368 = vld [vmem:[#allocation2 + $0x98] sm:$0x1]
        %v369 = vsel %vm331, 0, %v368
        %370 = vst [vmem:[#allocation2 + $0x98] sm:$0x1] %v369
        %v371 = vld [vmem:[#allocation2 + $0xa4] sm:$0x1]
        %v372 = vsel %vm331, 0, %v371
        %373 = vst [vmem:[#allocation2 + $0xa4] sm:$0x1] %v372
        %v374 = vld [vmem:[#allocation2 + $0xb0] sm:$0x1]
        %v375 = vsel %vm331, 0, %v374
        %376 = vst [vmem:[#allocation2 + $0xb0] sm:$0x1] %v375
        %v377 = vld [vmem:[#allocation2 + $0xbc] sm:$0x1]
        %v378 = vsel %vm331, 0, %v377
        %379 = vst [vmem:[#allocation2 + $0xbc] sm:$0x1] %v378
        %v380 = vld [vmem:[#allocation2 + $0xc8] sm:$0x1]
        %v381 = vsel %vm331, 0, %v380
        %382 = vst [vmem:[#allocation2 + $0xc8] sm:$0x1] %v381
        %v383 = vld [vmem:[#allocation2 + $0xd4] sm:$0x1]
        %v384 = vsel %vm331, 0, %v383
        %385 = vst [vmem:[#allocation2 + $0xd4] sm:$0x1] %v384
        %v386 = vld [vmem:[%s1] sm:$0xf]
        %v387 = vld [vmem:[%s2] sm:$0x1]
        loop: start=0, step=1, limit=2
        $region41: #{tpu_custom_call.1} parent=39 // loop_pre_header
          _
        $region42: #{tpu_custom_call.1} parent=39 // loop_header
          %s389 = sphi 0, %s393
          %p390 = scmp.ge.s32.totalorder %s389, 2
        $region43: #{tpu_custom_call.1} parent=39 // loop_header_branch
          %392 = sbr.rel (%p390) target = $region47
        $region44: #{tpu_custom_call.1} parent=39 // loop_body
          %s394 = smul.u32 %s389, 8
          %s395 = smul.u32 %s394, 16
          %s396 = scalar_lea.vmem %s257, %s395
          %v397 = vld [vmem:[%s396] sm:$0xff]
          %v398 = vld [vmem:[%s396 + $0x8] sm:$0xff]
          %v399 = vld [vmem:[%s396 + $0x10] sm:$0xff]
          %v400 = vld [vmem:[%s396 + $0x18] sm:$0xff]
          %v401 = vld [vmem:[%s396 + $0x20] sm:$0xff]
          %v402 = vld [vmem:[%s396 + $0x28] sm:$0xff]
          %v403 = vld [vmem:[%s396 + $0x30] sm:$0xff]
          %v404 = vld [vmem:[%s396 + $0x38] sm:$0xff]
          %v405 = vld [vmem:[%s396 + $0x40] sm:$0xff]
          %v406 = vld [vmem:[%s396 + $0x48] sm:$0xff]
          %v407 = vld [vmem:[%s396 + $0x50] sm:$0xff]
          %v408 = vld [vmem:[%s396 + $0x58] sm:$0xff]
          %v409 = vld [vmem:[%s396 + $0x60] sm:$0xff]
          %v410 = vld [vmem:[%s396 + $0x68] sm:$0xff]
          %v411 = vld [vmem:[%s396 + $0x70] sm:$0xff]
          %v412 = vld [vmem:[%s396 + $0x78] sm:$0xff]
          %v413 = vpack.c.bf16 %v398, %v397
          %v414 = vpack.c.bf16 %v400, %v399
          %v415 = vpack.c.bf16 %v402, %v401
          %v416 = vpack.c.bf16 %v404, %v403
          %v417 = vpack.c.bf16 %v406, %v405
          %v418 = vpack.c.bf16 %v408, %v407
          %v419 = vpack.c.bf16 %v410, %v409
          %v420 = vpack.c.bf16 %v412, %v411
          %v422 = vlaneseq
          %v423 = vshrl.u32 %v422, 7
          %v424 = vsub.s32 0, %v423
          %v425 = vrot.slane %v387, %v424
          %vm427 = vcmask 64512
          %v429 = vsel %vm427, %v413, 0
          %v432 = vsel %vm427, %v414, 0
          %v435 = vsel %vm427, %v415, 0
          %v438 = vsel %vm427, %v416, 0
          %v441 = vsel %vm427, %v417, 0
          %v444 = vsel %vm427, %v418, 0
          %v447 = vsel %vm427, %v419, 0
          %v450 = vsel %vm427, %v420, 0
          %vm452 = vcmask 1043456
          %v454 = vsel %vm452, %v386, 0
          %456 = vmatprep.subr.bf16.mxu0 0
          %457 = vmatpush1.bf16.msra.mxu0 %v454
          %458 = vmatprep.subr.bf16.mxu0 0
          %459 = vmatpush1.bf16.msra.mxu0 0
          %460 = vmatprep.subr.bf16.mxu0 0
          %461 = vmatpush1.bf16.msra.mxu0 0
          %462 = vmatprep.subr.bf16.mxu0 0
          %463 = vmatpush1.bf16.msra.mxu0 0
          %464 = vmatprep.subr.bf16.mxu0 0
          %465 = vmatpush1.bf16.msra.mxu0 0
          %466 = vmatprep.subr.bf16.mxu0 0
          %467 = vmatpush1.bf16.msra.mxu0 0
          %468 = vmatprep.subr.bf16.mxu0 0
          %469 = vmatpush1.bf16.msra.mxu0 0
          %470 = vmatprep.subr.bf16.mxu0 0
          %471 = vmatpush1.bf16.msra.mxu0 0
          %472 = vmatprep.subr.bf16.mxu0 0
          %473 = vmatpush1.bf16.msra.mxu0 0
          %474 = vmatprep.subr.bf16.mxu0 0
          %475 = vmatpush1.bf16.msra.mxu0 0
          %476 = vmatprep.subr.bf16.mxu0 0
          %477 = vmatpush1.bf16.msra.mxu0 0
          %478 = vmatprep.subr.bf16.mxu0 0
          %479 = vmatpush1.bf16.msra.mxu0 0
          %480 = vmatprep.subr.bf16.mxu0 0
          %481 = vmatpush1.bf16.msra.mxu0 0
          %482 = vmatprep.subr.bf16.mxu0 0
          %483 = vmatpush1.bf16.msra.mxu0 0
          %484 = vmatprep.subr.bf16.mxu0 0
          %485 = vmatpush1.bf16.msra.mxu0 0
          %486 = vmatprep.subr.bf16.mxu0 0
          %487 = vmatpush1.bf16.msra.mxu0 0
          %488 = vmatprep.mubr.bf16.mxu0 0
          %489 = vmatmul.mubr.bf16.gmra.mrb[0].mxu0 %v429
          %v490 = vpop.f32.mrb[0].mxu0
          %v491 = vadd.f32 %v425, %v490
          %v492 = vpop.f32.mrb[0].mxu0
          %v493 = vpop.f32.mrb[0].mxu0
          %v494 = vadd.f32 %v425, %v493
          %v495 = vpop.f32.mrb[0].mxu0
          %496 = vmatprep.mubr.bf16.mxu0 0
          %497 = vmatmul.mubr.bf16.gmra.mrb[0].mxu0 %v432
          %v498 = vpop.f32.mrb[0].mxu0
          %v499 = vadd.f32 %v425, %v498
          %v500 = vpop.f32.mrb[0].mxu0
          %v501 = vpop.f32.mrb[0].mxu0
          %v502 = vadd.f32 %v425, %v501
          %v503 = vpop.f32.mrb[0].mxu0
          %504 = vmatprep.mubr.bf16.mxu0 0
          %505 = vmatmul.mubr.bf16.gmra.mrb[0].mxu0 %v435
          %v506 = vpop.f32.mrb[0].mxu0
          %v507 = vadd.f32 %v425, %v506
          %v508 = vpop.f32.mrb[0].mxu0
          %v509 = vpop.f32.mrb[0].mxu0
          %v510 = vadd.f32 %v425, %v509
          %v511 = vpop.f32.mrb[0].mxu0
          %512 = vmatprep.mubr.bf16.mxu0 0
          %513 = vmatmul.mubr.bf16.gmra.mrb[0].mxu0 %v438
          %v514 = vpop.f32.mrb[0].mxu0
          %v515 = vadd.f32 %v425, %v514
          %v516 = vpop.f32.mrb[0].mxu0
          %v517 = vpop.f32.mrb[0].mxu0
          %v518 = vadd.f32 %v425, %v517
          %v519 = vpop.f32.mrb[0].mxu0
          %520 = vmatprep.mubr.bf16.mxu0 0
          %521 = vmatmul.mubr.bf16.gmra.mrb[0].mxu0 %v441
          %v522 = vpop.f32.mrb[0].mxu0
          %v523 = vadd.f32 %v425, %v522
          %v524 = vpop.f32.mrb[0].mxu0
          %v525 = vpop.f32.mrb[0].mxu0
          %v526 = vadd.f32 %v425, %v525
          %v527 = vpop.f32.mrb[0].mxu0
          %528 = vmatprep.mubr.bf16.mxu0 0
          %529 = vmatmul.mubr.bf16.gmra.mrb[0].mxu0 %v444
          %v530 = vpop.f32.mrb[0].mxu0
          %v531 = vadd.f32 %v425, %v530
          %v532 = vpop.f32.mrb[0].mxu0
          %v533 = vpop.f32.mrb[0].mxu0
          %v534 = vadd.f32 %v425, %v533
          %v535 = vpop.f32.mrb[0].mxu0
          %536 = vmatprep.mubr.bf16.mxu0 0
          %537 = vmatmul.mubr.bf16.gmra.mrb[0].mxu0 %v447
          %v538 = vpop.f32.mrb[0].mxu0
          %v539 = vadd.f32 %v425, %v538
          %v540 = vpop.f32.mrb[0].mxu0
          %v541 = vpop.f32.mrb[0].mxu0
          %v542 = vadd.f32 %v425, %v541
          %v543 = vpop.f32.mrb[0].mxu0
          %544 = vmatprep.mubr.bf16.mxu0 0
          %545 = vmatmul.mubr.bf16.gmra.mrb[0].mxu0 %v450
          %v546 = vpop.f32.mrb[0].mxu0
          %v547 = vadd.f32 %v425, %v546
          %v548 = vpop.f32.mrb[0].mxu0
          %v549 = vpop.f32.mrb[0].mxu0
          %v550 = vadd.f32 %v425, %v549
          %v551 = vpop.f32.mrb[0].mxu0
          %552 = vdwg.mxu0
          %v553 = vpack.c.bf16 %v494, %v491
          %v554 = vpack.c.bf16 %v502, %v499
          %v555 = vpack.c.bf16 %v510, %v507
          %v556 = vpack.c.bf16 %v518, %v515
          %v557 = vpack.c.bf16 %v526, %v523
          %v558 = vpack.c.bf16 %v534, %v531
          %v559 = vpack.c.bf16 %v542, %v539
          %v560 = vpack.c.bf16 %v550, %v547
          %s561 = sadd.s32 %s394, 1
          %v570 = vunpack.c.l.b16 %v553
          %v571 = vunpack.c.h.b16 %v553
          %v572 = vunpack.c.l.b16 %v554
          %v573 = vunpack.c.h.b16 %v554
          %v574 = vunpack.c.l.b16 %v555
          %v575 = vunpack.c.h.b16 %v555
          %v576 = vunpack.c.l.b16 %v556
          %v577 = vunpack.c.h.b16 %v556
          %v578 = vunpack.c.l.b16 %v557
          %v579 = vunpack.c.h.b16 %v557
          %v580 = vunpack.c.l.b16 %v558
          %v581 = vunpack.c.h.b16 %v558
          %v582 = vunpack.c.l.b16 %v559
          %v583 = vunpack.c.h.b16 %v559
          %v584 = vunpack.c.l.b16 %v560
          %v585 = vunpack.c.h.b16 %v560
          %v586 = vpack.c.b16 %v570, %v570
          %v587 = vpack.c.b16 %v571, %v571
          %v588 = vpack.c.b16 %v572, %v572
          %v589 = vpack.c.b16 %v573, %v573
          %v590 = vpack.c.b16 %v574, %v574
          %v591 = vpack.c.b16 %v575, %v575
          %v592 = vpack.c.b16 %v576, %v576
          %v593 = vpack.c.b16 %v577, %v577
          %v594 = vpack.c.b16 %v578, %v578
          %v595 = vpack.c.b16 %v579, %v579
          %v596 = vpack.c.b16 %v580, %v580
          %v597 = vpack.c.b16 %v581, %v581
          %v598 = vpack.c.b16 %v582, %v582
          %v599 = vpack.c.b16 %v583, %v583
          %v600 = vpack.c.b16 %v584, %v584
          %v601 = vpack.c.b16 %v585, %v585
          %vm602 = vsmask.f32 4368
          %vm603 = vmor %vm274, %vm602
          %v605 = vshrl.u32 %v586, 16
          %v607 = vrot.slane %v605, 7
          %v608 = vshll.u32 %v586, 16
          %v610 = vor.u32 %v607, %v608
          %v611 = vrot.slane %v607, 4
          %v613 = vshrl.u32 %v587, 16
          %v615 = vrot.slane %v613, 7
          %v616 = vshll.u32 %v587, 16
          %v618 = vor.u32 %v615, %v616
          %v619 = vsel %vm603, %v611, %v618
          %v620 = vrot.slane %v615, 4
          %v622 = vshrl.u32 %v588, 16
          %v624 = vrot.slane %v622, 7
          %v625 = vshll.u32 %v588, 16
          %v627 = vor.u32 %v624, %v625
          %v628 = vrot.slane %v624, 4
          %v630 = vshrl.u32 %v589, 16
          %v632 = vrot.slane %v630, 7
          %v633 = vshll.u32 %v589, 16
          %v635 = vor.u32 %v632, %v633
          %v636 = vsel %vm603, %v628, %v635
          %v637 = vrot.slane %v632, 4
          %v639 = vshrl.u32 %v590, 16
          %v641 = vrot.slane %v639, 7
          %v642 = vshll.u32 %v590, 16
          %v644 = vor.u32 %v641, %v642
          %v645 = vrot.slane %v641, 4
          %v647 = vshrl.u32 %v591, 16
          %v649 = vrot.slane %v647, 7
          %v650 = vshll.u32 %v591, 16
          %v652 = vor.u32 %v649, %v650
          %v653 = vsel %vm603, %v645, %v652
          %v654 = vrot.slane %v649, 4
          %v656 = vshrl.u32 %v592, 16
          %v658 = vrot.slane %v656, 7
          %v659 = vshll.u32 %v592, 16
          %v661 = vor.u32 %v658, %v659
          %v662 = vrot.slane %v658, 4
          %v664 = vshrl.u32 %v593, 16
          %v666 = vrot.slane %v664, 7
          %v667 = vshll.u32 %v593, 16
          %v669 = vor.u32 %v666, %v667
          %v670 = vsel %vm603, %v662, %v669
          %v671 = vrot.slane %v666, 4
          %v673 = vshrl.u32 %v594, 16
          %v675 = vrot.slane %v673, 7
          %v676 = vshll.u32 %v594, 16
          %v678 = vor.u32 %v675, %v676
          %v679 = vrot.slane %v675, 4
          %v681 = vshrl.u32 %v595, 16
          %v683 = vrot.slane %v681, 7
          %v684 = vshll.u32 %v595, 16
          %v686 = vor.u32 %v683, %v684
          %v687 = vsel %vm603, %v679, %v686
          %v688 = vrot.slane %v683, 4
          %v690 = vshrl.u32 %v596, 16
          %v692 = vrot.slane %v690, 7
          %v693 = vshll.u32 %v596, 16
          %v695 = vor.u32 %v692, %v693
          %v696 = vrot.slane %v692, 4
          %v698 = vshrl.u32 %v597, 16
          %v700 = vrot.slane %v698, 7
          %v701 = vshll.u32 %v597, 16
          %v703 = vor.u32 %v700, %v701
          %v704 = vsel %vm603, %v696, %v703
          %v705 = vrot.slane %v700, 4
          %v707 = vshrl.u32 %v598, 16
          %v709 = vrot.slane %v707, 7
          %v710 = vshll.u32 %v598, 16
          %v712 = vor.u32 %v709, %v710
          %v713 = vrot.slane %v709, 4
          %v715 = vshrl.u32 %v599, 16
          %v717 = vrot.slane %v715, 7
          %v718 = vshll.u32 %v599, 16
          %v720 = vor.u32 %v717, %v718
          %v721 = vsel %vm603, %v713, %v720
          %v722 = vrot.slane %v717, 4
          %v724 = vshrl.u32 %v600, 16
          %v726 = vrot.slane %v724, 7
          %v727 = vshll.u32 %v600, 16
          %v729 = vor.u32 %v726, %v727
          %v730 = vrot.slane %v726, 4
          %v732 = vshrl.u32 %v601, 16
          %v734 = vrot.slane %v732, 7
          %v735 = vshll.u32 %v601, 16
          %v737 = vor.u32 %v734, %v735
          %v738 = vsel %vm603, %v730, %v737
          %v739 = vrot.slane %v734, 4
          %s764 = smul.u32 %s561, 3
          %s765 = smul.addr %s764, 4
          %s766 = scalar_lea.vmem [#allocation2], %s765
          %vm767 = vcmask 257024
          %vm768 = vmand %vm767, %vm330
          %v769 = vld [vmem:[%s766] sm:$0xf]
          %v770 = vsel %vm768, %v610, %v769
          %771 = vst [vmem:[%s766] sm:$0xf] %v770
          %772 = vst.msk [vmem:[%s766 + $0x4] sm:$0xf] %vm264, %v619
          %v773 = vld [vmem:[%s766 + $0x8] sm:$0x1]
          %v774 = vsel %vm275, %v620, %v773
          %775 = vst [vmem:[%s766 + $0x8] sm:$0x1] %v774
          %v776 = vld [vmem:[%s766 + $0xc] sm:$0xf]
          %v777 = vsel %vm768, %v627, %v776
          %778 = vst [vmem:[%s766 + $0xc] sm:$0xf] %v777
          %779 = vst.msk [vmem:[%s766 + $0x10] sm:$0xf] %vm264, %v636
          %v780 = vld [vmem:[%s766 + $0x14] sm:$0x1]
          %v781 = vsel %vm275, %v637, %v780
          %782 = vst [vmem:[%s766 + $0x14] sm:$0x1] %v781
          %v783 = vld [vmem:[%s766 + $0x18] sm:$0xf]
          %v784 = vsel %vm768, %v644, %v783
          %785 = vst [vmem:[%s766 + $0x18] sm:$0xf] %v784
          %786 = vst.msk [vmem:[%s766 + $0x1c] sm:$0xf] %vm264, %v653
          %v787 = vld [vmem:[%s766 + $0x20] sm:$0x1]
          %v788 = vsel %vm275, %v654, %v787
          %789 = vst [vmem:[%s766 + $0x20] sm:$0x1] %v788
          %v790 = vld [vmem:[%s766 + $0x24] sm:$0xf]
          %v791 = vsel %vm768, %v661, %v790
          %792 = vst [vmem:[%s766 + $0x24] sm:$0xf] %v791
          %793 = vst.msk [vmem:[%s766 + $0x28] sm:$0xf] %vm264, %v670
          %v794 = vld [vmem:[%s766 + $0x2c] sm:$0x1]
          %v795 = vsel %vm275, %v671, %v794
          %796 = vst [vmem:[%s766 + $0x2c] sm:$0x1] %v795
          %v797 = vld [vmem:[%s766 + $0x30] sm:$0xf]
          %v798 = vsel %vm768, %v678, %v797
          %799 = vst [vmem:[%s766 + $0x30] sm:$0xf] %v798
          %800 = vst.msk [vmem:[%s766 + $0x34] sm:$0xf] %vm264, %v687
          %v801 = vld [vmem:[%s766 + $0x38] sm:$0x1]
          %v802 = vsel %vm275, %v688, %v801
          %803 = vst [vmem:[%s766 + $0x38] sm:$0x1] %v802
          %v804 = vld [vmem:[%s766 + $0x3c] sm:$0xf]
          %v805 = vsel %vm768, %v695, %v804
          %806 = vst [vmem:[%s766 + $0x3c] sm:$0xf] %v805
          %807 = vst.msk [vmem:[%s766 + $0x40] sm:$0xf] %vm264, %v704
          %v808 = vld [vmem:[%s766 + $0x44] sm:$0x1]
          %v809 = vsel %vm275, %v705, %v808
          %810 = vst [vmem:[%s766 + $0x44] sm:$0x1] %v809
          %v811 = vld [vmem:[%s766 + $0x48] sm:$0xf]
          %v812 = vsel %vm768, %v712, %v811
          %813 = vst [vmem:[%s766 + $0x48] sm:$0xf] %v812
          %814 = vst.msk [vmem:[%s766 + $0x4c] sm:$0xf] %vm264, %v721
          %v815 = vld [vmem:[%s766 + $0x50] sm:$0x1]
          %v816 = vsel %vm275, %v722, %v815
          %817 = vst [vmem:[%s766 + $0x50] sm:$0x1] %v816
          %v818 = vld [vmem:[%s766 + $0x54] sm:$0xf]
          %v819 = vsel %vm768, %v729, %v818
          %820 = vst [vmem:[%s766 + $0x54] sm:$0xf] %v819
          %821 = vst.msk [vmem:[%s766 + $0x58] sm:$0xf] %vm264, %v738
          %v822 = vld [vmem:[%s766 + $0x5c] sm:$0x1]
          %v823 = vsel %vm275, %v739, %v822
          %824 = vst [vmem:[%s766 + $0x5c] sm:$0x1] %v823
        $region45: #{tpu_custom_call.1} parent=39 // loop_footer
          %s393 = sadd.s32 1, %s389
        $region46: #{tpu_custom_call.1} parent=39 // loop_footer_branch
          %388 = sbr.rel target = $region42
        $region47: #{tpu_custom_call.1} parent=39 // loop_exit
          _
        %v825 = vld [vmem:[%s3] sm:$0xf]
        %v826 = vld [vmem:[%s3 + $0x4] sm:$0xf]
        %v827 = vld [vmem:[%s3 + $0x8] sm:$0xf]
        %v828 = vld [vmem:[%s3 + $0xc] sm:$0xf]
        %v829 = vld [vmem:[%s3 + $0x10] sm:$0xf]
        %v830 = vld [vmem:[%s3 + $0x14] sm:$0xf]
        %v831 = vld [vmem:[%s3 + $0x18] sm:$0xf]
        %v832 = vld [vmem:[%s3 + $0x1c] sm:$0xf]
        %v833 = vld [vmem:[%s3 + $0x20] sm:$0xf]
        %v834 = vld [vmem:[%s3 + $0x24] sm:$0xf]
        %v835 = vld [vmem:[%s3 + $0x28] sm:$0xf]
        %v836 = vld [vmem:[%s3 + $0x2c] sm:$0xf]
        %s837 = scalar_lea.vmem %s3, 48
        %v838 = vld [vmem:[%s837] sm:$0xf]
        %v839 = vld [vmem:[%s837 + $0x4] sm:$0xf]
        %v840 = vld [vmem:[%s837 + $0x8] sm:$0xf]
        %v841 = vld [vmem:[%s837 + $0xc] sm:$0xf]
        %v842 = vld [vmem:[%s837 + $0x10] sm:$0xf]
        %v843 = vld [vmem:[%s837 + $0x14] sm:$0xf]
        %v844 = vld [vmem:[%s837 + $0x18] sm:$0xf]
        %v845 = vld [vmem:[%s837 + $0x1c] sm:$0xf]
        %v846 = vld [vmem:[%s837 + $0x20] sm:$0xf]
        %v847 = vld [vmem:[%s837 + $0x24] sm:$0xf]
        %v848 = vld [vmem:[%s837 + $0x28] sm:$0xf]
        %v849 = vld [vmem:[%s837 + $0x2c] sm:$0xf]
        %s850 = scalar_lea.vmem %s3, 96
        %v851 = vld [vmem:[%s850] sm:$0xf]
        %v852 = vld [vmem:[%s850 + $0x4] sm:$0xf]
        %v853 = vld [vmem:[%s850 + $0x8] sm:$0xf]
        %v854 = vld [vmem:[%s850 + $0xc] sm:$0xf]
        %v855 = vld [vmem:[%s850 + $0x10] sm:$0xf]
        %v856 = vld [vmem:[%s850 + $0x14] sm:$0xf]
        %v857 = vld [vmem:[%s850 + $0x18] sm:$0xf]
        %v858 = vld [vmem:[%s850 + $0x1c] sm:$0xf]
        %v859 = vld [vmem:[%s850 + $0x20] sm:$0xf]
        %v860 = vld [vmem:[%s850 + $0x24] sm:$0xf]
        %v861 = vld [vmem:[%s850 + $0x28] sm:$0xf]
        %v862 = vld [vmem:[%s850 + $0x2c] sm:$0xf]
        %v863 = vld [vmem:[%s4] sm:$0x1]
        %v865 = vlaneseq
        %v866 = vshrl.u32 %v865, 7
        %v867 = vsub.s32 0, %v866
        %v868 = vrot.slane %v863, %v867
        loop: start=0, step=1, limit=2
        $region48: #{tpu_custom_call.1} parent=39 // loop_pre_header
          _
        $region49: #{tpu_custom_call.1} parent=39 // loop_header
          %s871 = sphi 0, %s875
          %p872 = scmp.ge.s32.totalorder %s871, 2
        $region50: #{tpu_custom_call.1} parent=39 // loop_header_branch
          %874 = sbr.rel (%p872) target = $region54
        $region51: #{tpu_custom_call.1} parent=39 // loop_body
          %s876 = smul.u32 %s871, 8
          %s877 = smul.u32 %s876, 3
          %s878 = smul.addr %s877, 4
          %s879 = scalar_lea.vmem [#allocation2], %s878
          %v880 = vld [vmem:[%s879] sm:$0xf]
          %v881 = vld [vmem:[%s879 + $0x4] sm:$0xf]
          %v882 = vld [vmem:[%s879 + $0x8] sm:$0x1]
          %v883 = vld [vmem:[%s879 + $0xc] sm:$0xf]
          %v884 = vld [vmem:[%s879 + $0x10] sm:$0xf]
          %v885 = vld [vmem:[%s879 + $0x14] sm:$0x1]
          %v886 = vld [vmem:[%s879 + $0x18] sm:$0xf]
          %v887 = vld [vmem:[%s879 + $0x1c] sm:$0xf]
          %v888 = vld [vmem:[%s879 + $0x20] sm:$0x1]
          %v889 = vld [vmem:[%s879 + $0x24] sm:$0xf]
          %v890 = vld [vmem:[%s879 + $0x28] sm:$0xf]
          %v891 = vld [vmem:[%s879 + $0x2c] sm:$0x1]
          %v892 = vld [vmem:[%s879 + $0x30] sm:$0xf]
          %v893 = vld [vmem:[%s879 + $0x34] sm:$0xf]
          %v894 = vld [vmem:[%s879 + $0x38] sm:$0x1]
          %v895 = vld [vmem:[%s879 + $0x3c] sm:$0xf]
          %v896 = vld [vmem:[%s879 + $0x40] sm:$0xf]
          %v897 = vld [vmem:[%s879 + $0x44] sm:$0x1]
          %v898 = vld [vmem:[%s879 + $0x48] sm:$0xf]
          %v899 = vld [vmem:[%s879 + $0x4c] sm:$0xf]
          %v900 = vld [vmem:[%s879 + $0x50] sm:$0x1]
          %v901 = vld [vmem:[%s879 + $0x54] sm:$0xf]
          %v902 = vld [vmem:[%s879 + $0x58] sm:$0xf]
          %v903 = vld [vmem:[%s879 + $0x5c] sm:$0x1]
          %v920 = vunpack.c.l.b16 %v880
          %v921 = vunpack.c.l.b16 %v881
          %v922 = vunpack.c.l.b16 %v883
          %v923 = vunpack.c.l.b16 %v884
          %v924 = vunpack.c.l.b16 %v886
          %v925 = vunpack.c.l.b16 %v887
          %v926 = vunpack.c.l.b16 %v889
          %v927 = vunpack.c.l.b16 %v890
          %v928 = vunpack.c.l.b16 %v892
          %v929 = vunpack.c.l.b16 %v893
          %v930 = vunpack.c.l.b16 %v895
          %v931 = vunpack.c.l.b16 %v896
          %v932 = vunpack.c.l.b16 %v898
          %v933 = vunpack.c.l.b16 %v899
          %v934 = vunpack.c.l.b16 %v901
          %v935 = vunpack.c.l.b16 %v902
          %v936 = vpack.c.b16 %v921, %v920
          %v937 = vpack.c.b16 %v923, %v922
          %v938 = vpack.c.b16 %v925, %v924
          %v939 = vpack.c.b16 %v927, %v926
          %v940 = vpack.c.b16 %v929, %v928
          %v941 = vpack.c.b16 %v931, %v930
          %v942 = vpack.c.b16 %v933, %v932
          %v943 = vpack.c.b16 %v935, %v934
          %v952 = vunpack.c.l.b16 %v882
          %v953 = vunpack.c.l.b16 %v885
          %v954 = vunpack.c.l.b16 %v888
          %v955 = vunpack.c.l.b16 %v891
          %v956 = vunpack.c.l.b16 %v894
          %v957 = vunpack.c.l.b16 %v897
          %v958 = vunpack.c.l.b16 %v900
          %v959 = vunpack.c.l.b16 %v903
          %v960 = vpack.c.b16 %v952, %v952
          %v961 = vpack.c.b16 %v953, %v953
          %v962 = vpack.c.b16 %v954, %v954
          %v963 = vpack.c.b16 %v955, %v955
          %v964 = vpack.c.b16 %v956, %v956
          %v965 = vpack.c.b16 %v957, %v957
          %v966 = vpack.c.b16 %v958, %v958
          %v967 = vpack.c.b16 %v959, %v959
          %vm968 = vsmask.f32 7424
          %v970 = vshrl.u32 %v936, 16
          %v972 = vshll.u32 %v936, 16
          %v974 = vrot.slane %v972, 1
          %v975 = vor.u32 %v970, %v974
          %v977 = vshll.u32 %v960, 16
          %v979 = vrot.slane %v977, 1
          %v980 = vsel %vm968, %v975, %v979
          %v982 = vshrl.u32 %v937, 16
          %v984 = vshll.u32 %v937, 16
          %v986 = vrot.slane %v984, 1
          %v987 = vor.u32 %v982, %v986
          %v989 = vshll.u32 %v961, 16
          %v991 = vrot.slane %v989, 1
          %v992 = vsel %vm968, %v987, %v991
          %v994 = vshrl.u32 %v938, 16
          %v996 = vshll.u32 %v938, 16
          %v998 = vrot.slane %v996, 1
          %v999 = vor.u32 %v994, %v998
          %v1001 = vshll.u32 %v962, 16
          %v1003 = vrot.slane %v1001, 1
          %v1004 = vsel %vm968, %v999, %v1003
          %v1006 = vshrl.u32 %v939, 16
          %v1008 = vshll.u32 %v939, 16
          %v1010 = vrot.slane %v1008, 1
          %v1011 = vor.u32 %v1006, %v1010
          %v1013 = vshll.u32 %v963, 16
          %v1015 = vrot.slane %v1013, 1
          %v1016 = vsel %vm968, %v1011, %v1015
          %v1018 = vshrl.u32 %v940, 16
          %v1020 = vshll.u32 %v940, 16
          %v1022 = vrot.slane %v1020, 1
          %v1023 = vor.u32 %v1018, %v1022
          %v1025 = vshll.u32 %v964, 16
          %v1027 = vrot.slane %v1025, 1
          %v1028 = vsel %vm968, %v1023, %v1027
          %v1030 = vshrl.u32 %v941, 16
          %v1032 = vshll.u32 %v941, 16
          %v1034 = vrot.slane %v1032, 1
          %v1035 = vor.u32 %v1030, %v1034
          %v1037 = vshll.u32 %v965, 16
          %v1039 = vrot.slane %v1037, 1
          %v1040 = vsel %vm968, %v1035, %v1039
          %v1042 = vshrl.u32 %v942, 16
          %v1044 = vshll.u32 %v942, 16
          %v1046 = vrot.slane %v1044, 1
          %v1047 = vor.u32 %v1042, %v1046
          %v1049 = vshll.u32 %v966, 16
          %v1051 = vrot.slane %v1049, 1
          %v1052 = vsel %vm968, %v1047, %v1051
          %v1054 = vshrl.u32 %v943, 16
          %v1056 = vshll.u32 %v943, 16
          %v1058 = vrot.slane %v1056, 1
          %v1059 = vor.u32 %v1054, %v1058
          %v1061 = vshll.u32 %v967, 16
          %v1063 = vrot.slane %v1061, 1
          %v1064 = vsel %vm968, %v1059, %v1063
          %1065 = vrot.lane.b32.xlu0 %v980, 32
          %v1066 = vpop.permute.xlu0 %1065
          %1067 = vrot.lane.b32.xlu0 %v992, 32
          %v1068 = vpop.permute.xlu0 %1067
          %1069 = vrot.lane.b32.xlu0 %v1004, 32
          %v1070 = vpop.permute.xlu0 %1069
          %1071 = vrot.lane.b32.xlu0 %v1016, 32
          %v1072 = vpop.permute.xlu0 %1071
          %1073 = vrot.lane.b32.xlu0 %v1028, 32
          %v1074 = vpop.permute.xlu0 %1073
          %1075 = vrot.lane.b32.xlu0 %v1040, 32
          %v1076 = vpop.permute.xlu0 %1075
          %1077 = vrot.lane.b32.xlu0 %v1052, 32
          %v1078 = vpop.permute.xlu0 %1077
          %1079 = vrot.lane.b32.xlu0 %v1064, 32
          %v1080 = vpop.permute.xlu0 %1079
          %vm1081 = vcmask 1046528
          %v1082 = vrot.slane %v936, 1
          %v1083 = vrot.slane %v960, 1
          %v1084 = vsel %vm1081, %v1082, %v1083
          %v1085 = vrot.slane %v937, 1
          %v1086 = vrot.slane %v961, 1
          %v1087 = vsel %vm1081, %v1085, %v1086
          %v1088 = vrot.slane %v938, 1
          %v1089 = vrot.slane %v962, 1
          %v1090 = vsel %vm1081, %v1088, %v1089
          %v1091 = vrot.slane %v939, 1
          %v1092 = vrot.slane %v963, 1
          %v1093 = vsel %vm1081, %v1091, %v1092
          %v1094 = vrot.slane %v940, 1
          %v1095 = vrot.slane %v964, 1
          %v1096 = vsel %vm1081, %v1094, %v1095
          %v1097 = vrot.slane %v941, 1
          %v1098 = vrot.slane %v965, 1
          %v1099 = vsel %vm1081, %v1097, %v1098
          %v1100 = vrot.slane %v942, 1
          %v1101 = vrot.slane %v966, 1
          %v1102 = vsel %vm1081, %v1100, %v1101
          %v1103 = vrot.slane %v943, 1
          %v1104 = vrot.slane %v967, 1
          %v1105 = vsel %vm1081, %v1103, %v1104
          %1106 = vrot.lane.b32.xlu0 %v1084, 64
          %v1107 = vpop.permute.xlu0 %1106
          %1108 = vrot.lane.b32.xlu0 %v1087, 64
          %v1109 = vpop.permute.xlu0 %1108
          %1110 = vrot.lane.b32.xlu0 %v1090, 64
          %v1111 = vpop.permute.xlu0 %1110
          %1112 = vrot.lane.b32.xlu0 %v1093, 64
          %v1113 = vpop.permute.xlu0 %1112
          %1114 = vrot.lane.b32.xlu0 %v1096, 64
          %v1115 = vpop.permute.xlu0 %1114
          %1116 = vrot.lane.b32.xlu0 %v1099, 64
          %v1117 = vpop.permute.xlu0 %1116
          %1118 = vrot.lane.b32.xlu0 %v1102, 64
          %v1119 = vpop.permute.xlu0 %1118
          %1120 = vrot.lane.b32.xlu0 %v1105, 64
          %v1121 = vpop.permute.xlu0 %1120
          %vm1122 = vcmask 261120
          %v1124 = vsel %vm1122, %v936, %v1066
          %v1126 = vsel %vm1122, %v937, %v1068
          %v1128 = vsel %vm1122, %v938, %v1070
          %v1130 = vsel %vm1122, %v939, %v1072
          %v1132 = vsel %vm1122, %v940, %v1074
          %v1134 = vsel %vm1122, %v941, %v1076
          %v1136 = vsel %vm1122, %v942, %v1078
          %v1138 = vsel %vm1122, %v943, %v1080
          %vm1139 = vcmask 523264
          %v1141 = vsel %vm1139, %v1124, %v1107
          %v1143 = vsel %vm1139, %v1126, %v1109
          %v1145 = vsel %vm1139, %v1128, %v1111
          %v1147 = vsel %vm1139, %v1130, %v1113
          %v1149 = vsel %vm1139, %v1132, %v1115
          %v1151 = vsel %vm1139, %v1134, %v1117
          %v1153 = vsel %vm1139, %v1136, %v1119
          %v1155 = vsel %vm1139, %v1138, %v1121
          %v1168 = vunpack.c.l.b16 %v825
          %v1169 = vunpack.c.l.b16 %v826
          %v1170 = vunpack.c.l.b16 %v827
          %v1171 = vunpack.c.l.b16 %v828
          %v1172 = vunpack.c.l.b16 %v829
          %v1173 = vunpack.c.l.b16 %v830
          %v1174 = vunpack.c.l.b16 %v831
          %v1175 = vunpack.c.l.b16 %v832
          %v1176 = vunpack.c.l.b16 %v833
          %v1177 = vunpack.c.l.b16 %v834
          %v1178 = vunpack.c.l.b16 %v835
          %v1179 = vunpack.c.l.b16 %v836
          %v1180 = vpack.c.b16 %v1169, %v1168
          %v1181 = vpack.c.b16 %v1171, %v1170
          %v1182 = vpack.c.b16 %v1173, %v1172
          %v1183 = vpack.c.b16 %v1175, %v1174
          %v1184 = vpack.c.b16 %v1177, %v1176
          %v1185 = vpack.c.b16 %v1179, %v1178
          %vm1192 = vcmask 785408
          %v1193 = vsel %vm1192, %v1141, 0
          %v1195 = vsel %vm1192, %v1143, 0
          %v1197 = vsel %vm1192, %v1145, 0
          %v1199 = vsel %vm1192, %v1147, 0
          %v1201 = vsel %vm1192, %v1149, 0
          %v1203 = vsel %vm1192, %v1151, 0
          %v1205 = vsel %vm1192, %v1153, 0
          %v1207 = vsel %vm1192, %v1155, 0
          %1209 = vmatprep.subr.bf16.mxu0 0
          %1210 = vmatpush1.bf16.msra.mxu0 %v1180
          %1211 = vmatprep.subr.bf16.mxu0 0
          %1212 = vmatpush1.bf16.msra.mxu0 %v1181
          %1213 = vmatprep.subr.bf16.mxu0 0
          %1214 = vmatpush1.bf16.msra.mxu0 %v1182
          %1215 = vmatprep.subr.bf16.mxu0 0
          %1216 = vmatpush1.bf16.msra.mxu0 %v1183
          %1217 = vmatprep.subr.bf16.mxu0 0
          %1218 = vmatpush1.bf16.msra.mxu0 %v1184
          %1219 = vmatprep.subr.bf16.mxu0 0
          %1220 = vmatpush1.bf16.msra.mxu0 %v1185
          %1221 = vmatprep.subr.bf16.mxu0 0
          %1222 = vmatpush1.bf16.msra.mxu0 0
          %1223 = vmatprep.subr.bf16.mxu0 0
          %1224 = vmatpush1.bf16.msra.mxu0 0
          %1225 = vmatprep.subr.bf16.mxu0 0
          %1226 = vmatpush1.bf16.msra.mxu0 0
          %1227 = vmatprep.subr.bf16.mxu0 0
          %1228 = vmatpush1.bf16.msra.mxu0 0
          %1229 = vmatprep.subr.bf16.mxu0 0
          %1230 = vmatpush1.bf16.msra.mxu0 0
          %1231 = vmatprep.subr.bf16.mxu0 0
          %1232 = vmatpush1.bf16.msra.mxu0 0
          %1233 = vmatprep.subr.bf16.mxu0 0
          %1234 = vmatpush1.bf16.msra.mxu0 0
          %1235 = vmatprep.subr.bf16.mxu0 0
          %1236 = vmatpush1.bf16.msra.mxu0 0
          %1237 = vmatprep.subr.bf16.mxu0 0
          %1238 = vmatpush1.bf16.msra.mxu0 0
          %1239 = vmatprep.subr.bf16.mxu0 0
          %1240 = vmatpush1.bf16.msra.mxu0 0
          %1241 = vmatprep.mubr.bf16.mxu0 0
          %1242 = vmatmul.mubr.bf16.gmra.mrb[0].mxu0 %v1193
          %v1243 = vpop.f32.mrb[0].mxu0
          %v1244 = vadd.f32 0.0, %v1243
          %v1245 = vpop.f32.mrb[0].mxu0
          %v1246 = vpop.f32.mrb[0].mxu0
          %v1247 = vadd.f32 0.0, %v1246
          %v1248 = vpop.f32.mrb[0].mxu0
          %1249 = vmatprep.mubr.bf16.mxu0 0
          %1250 = vmatmul.mubr.bf16.gmra.mrb[0].mxu0 %v1195
          %v1251 = vpop.f32.mrb[0].mxu0
          %v1252 = vadd.f32 0.0, %v1251
          %v1253 = vpop.f32.mrb[0].mxu0
          %v1254 = vpop.f32.mrb[0].mxu0
          %v1255 = vadd.f32 0.0, %v1254
          %v1256 = vpop.f32.mrb[0].mxu0
          %1257 = vmatprep.mubr.bf16.mxu0 0
          %1258 = vmatmul.mubr.bf16.gmra.mrb[0].mxu0 %v1197
          %v1259 = vpop.f32.mrb[0].mxu0
          %v1260 = vadd.f32 0.0, %v1259
          %v1261 = vpop.f32.mrb[0].mxu0
          %v1262 = vpop.f32.mrb[0].mxu0
          %v1263 = vadd.f32 0.0, %v1262
          %v1264 = vpop.f32.mrb[0].mxu0
          %1265 = vmatprep.mubr.bf16.mxu0 0
          %1266 = vmatmul.mubr.bf16.gmra.mrb[0].mxu0 %v1199
          %v1267 = vpop.f32.mrb[0].mxu0
          %v1268 = vadd.f32 0.0, %v1267
          %v1269 = vpop.f32.mrb[0].mxu0
          %v1270 = vpop.f32.mrb[0].mxu0
          %v1271 = vadd.f32 0.0, %v1270
          %v1272 = vpop.f32.mrb[0].mxu0
          %1273 = vmatprep.mubr.bf16.mxu0 0
          %1274 = vmatmul.mubr.bf16.gmra.mrb[0].mxu0 %v1201
          %v1275 = vpop.f32.mrb[0].mxu0
          %v1276 = vadd.f32 0.0, %v1275
          %v1277 = vpop.f32.mrb[0].mxu0
          %v1278 = vpop.f32.mrb[0].mxu0
          %v1279 = vadd.f32 0.0, %v1278
          %v1280 = vpop.f32.mrb[0].mxu0
          %1281 = vmatprep.mubr.bf16.mxu0 0
          %1282 = vmatmul.mubr.bf16.gmra.mrb[0].mxu0 %v1203
          %v1283 = vpop.f32.mrb[0].mxu0
          %v1284 = vadd.f32 0.0, %v1283
          %v1285 = vpop.f32.mrb[0].mxu0
          %v1286 = vpop.f32.mrb[0].mxu0
          %v1287 = vadd.f32 0.0, %v1286
          %v1288 = vpop.f32.mrb[0].mxu0
          %1289 = vmatprep.mubr.bf16.mxu0 0
          %1290 = vmatmul.mubr.bf16.gmra.mrb[0].mxu0 %v1205
          %v1291 = vpop.f32.mrb[0].mxu0
          %v1292 = vadd.f32 0.0, %v1291
          %v1293 = vpop.f32.mrb[0].mxu0
          %v1294 = vpop.f32.mrb[0].mxu0
          %v1295 = vadd.f32 0.0, %v1294
          %v1296 = vpop.f32.mrb[0].mxu0
          %1297 = vmatprep.mubr.bf16.mxu0 0
          %1298 = vmatmul.mubr.bf16.gmra.mrb[0].mxu0 %v1207
          %v1299 = vpop.f32.mrb[0].mxu0
          %v1300 = vadd.f32 0.0, %v1299
          %v1301 = vpop.f32.mrb[0].mxu0
          %v1302 = vpop.f32.mrb[0].mxu0
          %v1303 = vadd.f32 0.0, %v1302
          %v1304 = vpop.f32.mrb[0].mxu0
          %1305 = vdwg.mxu0
          %v1306 = vadd.f32 %v868, %v1244
          %v1307 = vadd.f32 %v868, %v1247
          %v1308 = vadd.f32 %v868, %v1252
          %v1309 = vadd.f32 %v868, %v1255
          %v1310 = vadd.f32 %v868, %v1260
          %v1311 = vadd.f32 %v868, %v1263
          %v1312 = vadd.f32 %v868, %v1268
          %v1313 = vadd.f32 %v868, %v1271
          %v1314 = vadd.f32 %v868, %v1276
          %v1315 = vadd.f32 %v868, %v1279
          %v1316 = vadd.f32 %v868, %v1284
          %v1317 = vadd.f32 %v868, %v1287
          %v1318 = vadd.f32 %v868, %v1292
          %v1319 = vadd.f32 %v868, %v1295
          %v1320 = vadd.f32 %v868, %v1300
          %v1321 = vadd.f32 %v868, %v1303
          %s1322 = sadd.s32 %s876, 1
          %s1323 = smul.u32 %s1322, 3
          %s1324 = smul.addr %s1323, 4
          %s1325 = scalar_lea.vmem [#allocation2], %s1324
          %v1326 = vld [vmem:[%s1325] sm:$0xf]
          %v1327 = vld [vmem:[%s1325 + $0x4] sm:$0xf]
          %v1328 = vld [vmem:[%s1325 + $0x8] sm:$0x1]
          %v1329 = vld [vmem:[%s1325 + $0xc] sm:$0xf]
          %v1330 = vld [vmem:[%s1325 + $0x10] sm:$0xf]
          %v1331 = vld [vmem:[%s1325 + $0x14] sm:$0x1]
          %v1332 = vld [vmem:[%s1325 + $0x18] sm:$0xf]
          %v1333 = vld [vmem:[%s1325 + $0x1c] sm:$0xf]
          %v1334 = vld [vmem:[%s1325 + $0x20] sm:$0x1]
          %v1335 = vld [vmem:[%s1325 + $0x24] sm:$0xf]
          %v1336 = vld [vmem:[%s1325 + $0x28] sm:$0xf]
          %v1337 = vld [vmem:[%s1325 + $0x2c] sm:$0x1]
          %v1338 = vld [vmem:[%s1325 + $0x30] sm:$0xf]
          %v1339 = vld [vmem:[%s1325 + $0x34] sm:$0xf]
          %v1340 = vld [vmem:[%s1325 + $0x38] sm:$0x1]
          %v1341 = vld [vmem:[%s1325 + $0x3c] sm:$0xf]
          %v1342 = vld [vmem:[%s1325 + $0x40] sm:$0xf]
          %v1343 = vld [vmem:[%s1325 + $0x44] sm:$0x1]
          %v1344 = vld [vmem:[%s1325 + $0x48] sm:$0xf]
          %v1345 = vld [vmem:[%s1325 + $0x4c] sm:$0xf]
          %v1346 = vld [vmem:[%s1325 + $0x50] sm:$0x1]
          %v1347 = vld [vmem:[%s1325 + $0x54] sm:$0xf]
          %v1348 = vld [vmem:[%s1325 + $0x58] sm:$0xf]
          %v1349 = vld [vmem:[%s1325 + $0x5c] sm:$0x1]
          %v1366 = vunpack.c.l.b16 %v1326
          %v1367 = vunpack.c.l.b16 %v1327
          %v1368 = vunpack.c.l.b16 %v1329
          %v1369 = vunpack.c.l.b16 %v1330
          %v1370 = vunpack.c.l.b16 %v1332
          %v1371 = vunpack.c.l.b16 %v1333
          %v1372 = vunpack.c.l.b16 %v1335
          %v1373 = vunpack.c.l.b16 %v1336
          %v1374 = vunpack.c.l.b16 %v1338
          %v1375 = vunpack.c.l.b16 %v1339
          %v1376 = vunpack.c.l.b16 %v1341
          %v1377 = vunpack.c.l.b16 %v1342
          %v1378 = vunpack.c.l.b16 %v1344
          %v1379 = vunpack.c.l.b16 %v1345
          %v1380 = vunpack.c.l.b16 %v1347
          %v1381 = vunpack.c.l.b16 %v1348
          %v1382 = vpack.c.b16 %v1367, %v1366
          %v1383 = vpack.c.b16 %v1369, %v1368
          %v1384 = vpack.c.b16 %v1371, %v1370
          %v1385 = vpack.c.b16 %v1373, %v1372
          %v1386 = vpack.c.b16 %v1375, %v1374
          %v1387 = vpack.c.b16 %v1377, %v1376
          %v1388 = vpack.c.b16 %v1379, %v1378
          %v1389 = vpack.c.b16 %v1381, %v1380
          %v1398 = vunpack.c.l.b16 %v1328
          %v1399 = vunpack.c.l.b16 %v1331
          %v1400 = vunpack.c.l.b16 %v1334
          %v1401 = vunpack.c.l.b16 %v1337
          %v1402 = vunpack.c.l.b16 %v1340
          %v1403 = vunpack.c.l.b16 %v1343
          %v1404 = vunpack.c.l.b16 %v1346
          %v1405 = vunpack.c.l.b16 %v1349
          %v1406 = vpack.c.b16 %v1398, %v1398
          %v1407 = vpack.c.b16 %v1399, %v1399
          %v1408 = vpack.c.b16 %v1400, %v1400
          %v1409 = vpack.c.b16 %v1401, %v1401
          %v1410 = vpack.c.b16 %v1402, %v1402
          %v1411 = vpack.c.b16 %v1403, %v1403
          %v1412 = vpack.c.b16 %v1404, %v1404
          %v1413 = vpack.c.b16 %v1405, %v1405
          %v1415 = vshrl.u32 %v1382, 16
          %v1417 = vshll.u32 %v1382, 16
          %v1419 = vrot.slane %v1417, 1
          %v1420 = vor.u32 %v1415, %v1419
          %v1422 = vshll.u32 %v1406, 16
          %v1424 = vrot.slane %v1422, 1
          %v1425 = vsel %vm968, %v1420, %v1424
          %v1427 = vshrl.u32 %v1383, 16
          %v1429 = vshll.u32 %v1383, 16
          %v1431 = vrot.slane %v1429, 1
          %v1432 = vor.u32 %v1427, %v1431
          %v1434 = vshll.u32 %v1407, 16
          %v1436 = vrot.slane %v1434, 1
          %v1437 = vsel %vm968, %v1432, %v1436
          %v1439 = vshrl.u32 %v1384, 16
          %v1441 = vshll.u32 %v1384, 16
          %v1443 = vrot.slane %v1441, 1
          %v1444 = vor.u32 %v1439, %v1443
          %v1446 = vshll.u32 %v1408, 16
          %v1448 = vrot.slane %v1446, 1
          %v1449 = vsel %vm968, %v1444, %v1448
          %v1451 = vshrl.u32 %v1385, 16
          %v1453 = vshll.u32 %v1385, 16
          %v1455 = vrot.slane %v1453, 1
          %v1456 = vor.u32 %v1451, %v1455
          %v1458 = vshll.u32 %v1409, 16
          %v1460 = vrot.slane %v1458, 1
          %v1461 = vsel %vm968, %v1456, %v1460
          %v1463 = vshrl.u32 %v1386, 16
          %v1465 = vshll.u32 %v1386, 16
          %v1467 = vrot.slane %v1465, 1
          %v1468 = vor.u32 %v1463, %v1467
          %v1470 = vshll.u32 %v1410, 16
          %v1472 = vrot.slane %v1470, 1
          %v1473 = vsel %vm968, %v1468, %v1472
          %v1475 = vshrl.u32 %v1387, 16
          %v1477 = vshll.u32 %v1387, 16
          %v1479 = vrot.slane %v1477, 1
          %v1480 = vor.u32 %v1475, %v1479
          %v1482 = vshll.u32 %v1411, 16
          %v1484 = vrot.slane %v1482, 1
          %v1485 = vsel %vm968, %v1480, %v1484
          %v1487 = vshrl.u32 %v1388, 16
          %v1489 = vshll.u32 %v1388, 16
          %v1491 = vrot.slane %v1489, 1
          %v1492 = vor.u32 %v1487, %v1491
          %v1494 = vshll.u32 %v1412, 16
          %v1496 = vrot.slane %v1494, 1
          %v1497 = vsel %vm968, %v1492, %v1496
          %v1499 = vshrl.u32 %v1389, 16
          %v1501 = vshll.u32 %v1389, 16
          %v1503 = vrot.slane %v1501, 1
          %v1504 = vor.u32 %v1499, %v1503
          %v1506 = vshll.u32 %v1413, 16
          %v1508 = vrot.slane %v1506, 1
          %v1509 = vsel %vm968, %v1504, %v1508
          %1510 = vrot.lane.b32.xlu0 %v1425, 32
          %v1511 = vpop.permute.xlu0 %1510
          %1512 = vrot.lane.b32.xlu0 %v1437, 32
          %v1513 = vpop.permute.xlu0 %1512
          %1514 = vrot.lane.b32.xlu0 %v1449, 32
          %v1515 = vpop.permute.xlu0 %1514
          %1516 = vrot.lane.b32.xlu0 %v1461, 32
          %v1517 = vpop.permute.xlu0 %1516
          %1518 = vrot.lane.b32.xlu0 %v1473, 32
          %v1519 = vpop.permute.xlu0 %1518
          %1520 = vrot.lane.b32.xlu0 %v1485, 32
          %v1521 = vpop.permute.xlu0 %1520
          %1522 = vrot.lane.b32.xlu0 %v1497, 32
          %v1523 = vpop.permute.xlu0 %1522
          %1524 = vrot.lane.b32.xlu0 %v1509, 32
          %v1525 = vpop.permute.xlu0 %1524
          %v1526 = vrot.slane %v1382, 1
          %v1527 = vrot.slane %v1406, 1
          %v1528 = vsel %vm1081, %v1526, %v1527
          %v1529 = vrot.slane %v1383, 1
          %v1530 = vrot.slane %v1407, 1
          %v1531 = vsel %vm1081, %v1529, %v1530
          %v1532 = vrot.slane %v1384, 1
          %v1533 = vrot.slane %v1408, 1
          %v1534 = vsel %vm1081, %v1532, %v1533
          %v1535 = vrot.slane %v1385, 1
          %v1536 = vrot.slane %v1409, 1
          %v1537 = vsel %vm1081, %v1535, %v1536
          %v1538 = vrot.slane %v1386, 1
          %v1539 = vrot.slane %v1410, 1
          %v1540 = vsel %vm1081, %v1538, %v1539
          %v1541 = vrot.slane %v1387, 1
          %v1542 = vrot.slane %v1411, 1
          %v1543 = vsel %vm1081, %v1541, %v1542
          %v1544 = vrot.slane %v1388, 1
          %v1545 = vrot.slane %v1412, 1
          %v1546 = vsel %vm1081, %v1544, %v1545
          %v1547 = vrot.slane %v1389, 1
          %v1548 = vrot.slane %v1413, 1
          %v1549 = vsel %vm1081, %v1547, %v1548
          %1550 = vrot.lane.b32.xlu0 %v1528, 64
          %v1551 = vpop.permute.xlu0 %1550
          %1552 = vrot.lane.b32.xlu0 %v1531, 64
          %v1553 = vpop.permute.xlu0 %1552
          %1554 = vrot.lane.b32.xlu0 %v1534, 64
          %v1555 = vpop.permute.xlu0 %1554
          %1556 = vrot.lane.b32.xlu0 %v1537, 64
          %v1557 = vpop.permute.xlu0 %1556
          %1558 = vrot.lane.b32.xlu0 %v1540, 64
          %v1559 = vpop.permute.xlu0 %1558
          %1560 = vrot.lane.b32.xlu0 %v1543, 64
          %v1561 = vpop.permute.xlu0 %1560
          %1562 = vrot.lane.b32.xlu0 %v1546, 64
          %v1563 = vpop.permute.xlu0 %1562
          %1564 = vrot.lane.b32.xlu0 %v1549, 64
          %v1565 = vpop.permute.xlu0 %1564
          %v1567 = vsel %vm1122, %v1382, %v1511
          %v1569 = vsel %vm1122, %v1383, %v1513
          %v1571 = vsel %vm1122, %v1384, %v1515
          %v1573 = vsel %vm1122, %v1385, %v1517
          %v1575 = vsel %vm1122, %v1386, %v1519
          %v1577 = vsel %vm1122, %v1387, %v1521
          %v1579 = vsel %vm1122, %v1388, %v1523
          %v1581 = vsel %vm1122, %v1389, %v1525
          %v1583 = vsel %vm1139, %v1567, %v1551
          %v1585 = vsel %vm1139, %v1569, %v1553
          %v1587 = vsel %vm1139, %v1571, %v1555
          %v1589 = vsel %vm1139, %v1573, %v1557
          %v1591 = vsel %vm1139, %v1575, %v1559
          %v1593 = vsel %vm1139, %v1577, %v1561
          %v1595 = vsel %vm1139, %v1579, %v1563
          %v1597 = vsel %vm1139, %v1581, %v1565
          %v1610 = vunpack.c.l.b16 %v838
          %v1611 = vunpack.c.l.b16 %v839
          %v1612 = vunpack.c.l.b16 %v840
          %v1613 = vunpack.c.l.b16 %v841
          %v1614 = vunpack.c.l.b16 %v842
          %v1615 = vunpack.c.l.b16 %v843
          %v1616 = vunpack.c.l.b16 %v844
          %v1617 = vunpack.c.l.b16 %v845
          %v1618 = vunpack.c.l.b16 %v846
          %v1619 = vunpack.c.l.b16 %v847
          %v1620 = vunpack.c.l.b16 %v848
          %v1621 = vunpack.c.l.b16 %v849
          %v1622 = vpack.c.b16 %v1611, %v1610
          %v1623 = vpack.c.b16 %v1613, %v1612
          %v1624 = vpack.c.b16 %v1615, %v1614
          %v1625 = vpack.c.b16 %v1617, %v1616
          %v1626 = vpack.c.b16 %v1619, %v1618
          %v1627 = vpack.c.b16 %v1621, %v1620
          %v1634 = vsel %vm1192, %v1583, 0
          %v1636 = vsel %vm1192, %v1585, 0
          %v1638 = vsel %vm1192, %v1587, 0
          %v1640 = vsel %vm1192, %v1589, 0
          %v1642 = vsel %vm1192, %v1591, 0
          %v1644 = vsel %vm1192, %v1593, 0
          %v1646 = vsel %vm1192, %v1595, 0
          %v1648 = vsel %vm1192, %v1597, 0
          %1650 = vmatprep.subr.bf16.mxu0 0
          %1651 = vmatpush1.bf16.msra.mxu0 %v1622
          %1652 = vmatprep.subr.bf16.mxu0 0
          %1653 = vmatpush1.bf16.msra.mxu0 %v1623
          %1654 = vmatprep.subr.bf16.mxu0 0
          %1655 = vmatpush1.bf16.msra.mxu0 %v1624
          %1656 = vmatprep.subr.bf16.mxu0 0
          %1657 = vmatpush1.bf16.msra.mxu0 %v1625
          %1658 = vmatprep.subr.bf16.mxu0 0
          %1659 = vmatpush1.bf16.msra.mxu0 %v1626
          %1660 = vmatprep.subr.bf16.mxu0 0
          %1661 = vmatpush1.bf16.msra.mxu0 %v1627
          %1662 = vmatprep.subr.bf16.mxu0 0
          %1663 = vmatpush1.bf16.msra.mxu0 0
          %1664 = vmatprep.subr.bf16.mxu0 0
          %1665 = vmatpush1.bf16.msra.mxu0 0
          %1666 = vmatprep.subr.bf16.mxu0 0
          %1667 = vmatpush1.bf16.msra.mxu0 0
          %1668 = vmatprep.subr.bf16.mxu0 0
          %1669 = vmatpush1.bf16.msra.mxu0 0
          %1670 = vmatprep.subr.bf16.mxu0 0
          %1671 = vmatpush1.bf16.msra.mxu0 0
          %1672 = vmatprep.subr.bf16.mxu0 0
          %1673 = vmatpush1.bf16.msra.mxu0 0
          %1674 = vmatprep.subr.bf16.mxu0 0
          %1675 = vmatpush1.bf16.msra.mxu0 0
          %1676 = vmatprep.subr.bf16.mxu0 0
          %1677 = vmatpush1.bf16.msra.mxu0 0
          %1678 = vmatprep.subr.bf16.mxu0 0
          %1679 = vmatpush1.bf16.msra.mxu0 0
          %1680 = vmatprep.subr.bf16.mxu0 0
          %1681 = vmatpush1.bf16.msra.mxu0 0
          %1682 = vmatprep.mubr.bf16.mxu0 0
          %1683 = vmatmul.mubr.bf16.gmra.mrb[0].mxu0 %v1634
          %v1684 = vpop.f32.mrb[0].mxu0
          %v1685 = vadd.f32 0.0, %v1684
          %v1686 = vpop.f32.mrb[0].mxu0
          %v1687 = vpop.f32.mrb[0].mxu0
          %v1688 = vadd.f32 0.0, %v1687
          %v1689 = vpop.f32.mrb[0].mxu0
          %1690 = vmatprep.mubr.bf16.mxu0 0
          %1691 = vmatmul.mubr.bf16.gmra.mrb[0].mxu0 %v1636
          %v1692 = vpop.f32.mrb[0].mxu0
          %v1693 = vadd.f32 0.0, %v1692
          %v1694 = vpop.f32.mrb[0].mxu0
          %v1695 = vpop.f32.mrb[0].mxu0
          %v1696 = vadd.f32 0.0, %v1695
          %v1697 = vpop.f32.mrb[0].mxu0
          %1698 = vmatprep.mubr.bf16.mxu0 0
          %1699 = vmatmul.mubr.bf16.gmra.mrb[0].mxu0 %v1638
          %v1700 = vpop.f32.mrb[0].mxu0
          %v1701 = vadd.f32 0.0, %v1700
          %v1702 = vpop.f32.mrb[0].mxu0
          %v1703 = vpop.f32.mrb[0].mxu0
          %v1704 = vadd.f32 0.0, %v1703
          %v1705 = vpop.f32.mrb[0].mxu0
          %1706 = vmatprep.mubr.bf16.mxu0 0
          %1707 = vmatmul.mubr.bf16.gmra.mrb[0].mxu0 %v1640
          %v1708 = vpop.f32.mrb[0].mxu0
          %v1709 = vadd.f32 0.0, %v1708
          %v1710 = vpop.f32.mrb[0].mxu0
          %v1711 = vpop.f32.mrb[0].mxu0
          %v1712 = vadd.f32 0.0, %v1711
          %v1713 = vpop.f32.mrb[0].mxu0
          %1714 = vmatprep.mubr.bf16.mxu0 0
          %1715 = vmatmul.mubr.bf16.gmra.mrb[0].mxu0 %v1642
          %v1716 = vpop.f32.mrb[0].mxu0
          %v1717 = vadd.f32 0.0, %v1716
          %v1718 = vpop.f32.mrb[0].mxu0
          %v1719 = vpop.f32.mrb[0].mxu0
          %v1720 = vadd.f32 0.0, %v1719
          %v1721 = vpop.f32.mrb[0].mxu0
          %1722 = vmatprep.mubr.bf16.mxu0 0
          %1723 = vmatmul.mubr.bf16.gmra.mrb[0].mxu0 %v1644
          %v1724 = vpop.f32.mrb[0].mxu0
          %v1725 = vadd.f32 0.0, %v1724
          %v1726 = vpop.f32.mrb[0].mxu0
          %v1727 = vpop.f32.mrb[0].mxu0
          %v1728 = vadd.f32 0.0, %v1727
          %v1729 = vpop.f32.mrb[0].mxu0
          %1730 = vmatprep.mubr.bf16.mxu0 0
          %1731 = vmatmul.mubr.bf16.gmra.mrb[0].mxu0 %v1646
          %v1732 = vpop.f32.mrb[0].mxu0
          %v1733 = vadd.f32 0.0, %v1732
          %v1734 = vpop.f32.mrb[0].mxu0
          %v1735 = vpop.f32.mrb[0].mxu0
          %v1736 = vadd.f32 0.0, %v1735
          %v1737 = vpop.f32.mrb[0].mxu0
          %1738 = vmatprep.mubr.bf16.mxu0 0
          %1739 = vmatmul.mubr.bf16.gmra.mrb[0].mxu0 %v1648
          %v1740 = vpop.f32.mrb[0].mxu0
          %v1741 = vadd.f32 0.0, %v1740
          %v1742 = vpop.f32.mrb[0].mxu0
          %v1743 = vpop.f32.mrb[0].mxu0
          %v1744 = vadd.f32 0.0, %v1743
          %v1745 = vpop.f32.mrb[0].mxu0
          %1746 = vdwg.mxu0
          %v1747 = vadd.f32 %v1306, %v1685
          %v1748 = vadd.f32 %v1307, %v1688
          %v1749 = vadd.f32 %v1308, %v1693
          %v1750 = vadd.f32 %v1309, %v1696
          %v1751 = vadd.f32 %v1310, %v1701
          %v1752 = vadd.f32 %v1311, %v1704
          %v1753 = vadd.f32 %v1312, %v1709
          %v1754 = vadd.f32 %v1313, %v1712
          %v1755 = vadd.f32 %v1314, %v1717
          %v1756 = vadd.f32 %v1315, %v1720
          %v1757 = vadd.f32 %v1316, %v1725
          %v1758 = vadd.f32 %v1317, %v1728
          %v1759 = vadd.f32 %v1318, %v1733
          %v1760 = vadd.f32 %v1319, %v1736
          %v1761 = vadd.f32 %v1320, %v1741
          %v1762 = vadd.f32 %v1321, %v1744
          %s1763 = sadd.s32 %s876, 2
          %s1764 = smul.u32 %s1763, 3
          %s1765 = smul.addr %s1764, 4
          %s1766 = scalar_lea.vmem [#allocation2], %s1765
          %v1767 = vld [vmem:[%s1766] sm:$0xf]
          %v1768 = vld [vmem:[%s1766 + $0x4] sm:$0xf]
          %v1769 = vld [vmem:[%s1766 + $0x8] sm:$0x1]
          %v1770 = vld [vmem:[%s1766 + $0xc] sm:$0xf]
          %v1771 = vld [vmem:[%s1766 + $0x10] sm:$0xf]
          %v1772 = vld [vmem:[%s1766 + $0x14] sm:$0x1]
          %v1773 = vld [vmem:[%s1766 + $0x18] sm:$0xf]
          %v1774 = vld [vmem:[%s1766 + $0x1c] sm:$0xf]
          %v1775 = vld [vmem:[%s1766 + $0x20] sm:$0x1]
          %v1776 = vld [vmem:[%s1766 + $0x24] sm:$0xf]
          %v1777 = vld [vmem:[%s1766 + $0x28] sm:$0xf]
          %v1778 = vld [vmem:[%s1766 + $0x2c] sm:$0x1]
          %v1779 = vld [vmem:[%s1766 + $0x30] sm:$0xf]
          %v1780 = vld [vmem:[%s1766 + $0x34] sm:$0xf]
          %v1781 = vld [vmem:[%s1766 + $0x38] sm:$0x1]
          %v1782 = vld [vmem:[%s1766 + $0x3c] sm:$0xf]
          %v1783 = vld [vmem:[%s1766 + $0x40] sm:$0xf]
          %v1784 = vld [vmem:[%s1766 + $0x44] sm:$0x1]
          %v1785 = vld [vmem:[%s1766 + $0x48] sm:$0xf]
          %v1786 = vld [vmem:[%s1766 + $0x4c] sm:$0xf]
          %v1787 = vld [vmem:[%s1766 + $0x50] sm:$0x1]
          %v1788 = vld [vmem:[%s1766 + $0x54] sm:$0xf]
          %v1789 = vld [vmem:[%s1766 + $0x58] sm:$0xf]
          %v1790 = vld [vmem:[%s1766 + $0x5c] sm:$0x1]
          %v1807 = vunpack.c.l.b16 %v1767
          %v1808 = vunpack.c.l.b16 %v1768
          %v1809 = vunpack.c.l.b16 %v1770
          %v1810 = vunpack.c.l.b16 %v1771
          %v1811 = vunpack.c.l.b16 %v1773
          %v1812 = vunpack.c.l.b16 %v1774
          %v1813 = vunpack.c.l.b16 %v1776
          %v1814 = vunpack.c.l.b16 %v1777
          %v1815 = vunpack.c.l.b16 %v1779
          %v1816 = vunpack.c.l.b16 %v1780
          %v1817 = vunpack.c.l.b16 %v1782
          %v1818 = vunpack.c.l.b16 %v1783
          %v1819 = vunpack.c.l.b16 %v1785
          %v1820 = vunpack.c.l.b16 %v1786
          %v1821 = vunpack.c.l.b16 %v1788
          %v1822 = vunpack.c.l.b16 %v1789
          %v1823 = vpack.c.b16 %v1808, %v1807
          %v1824 = vpack.c.b16 %v1810, %v1809
          %v1825 = vpack.c.b16 %v1812, %v1811
          %v1826 = vpack.c.b16 %v1814, %v1813
          %v1827 = vpack.c.b16 %v1816, %v1815
          %v1828 = vpack.c.b16 %v1818, %v1817
          %v1829 = vpack.c.b16 %v1820, %v1819
          %v1830 = vpack.c.b16 %v1822, %v1821
          %v1839 = vunpack.c.l.b16 %v1769
          %v1840 = vunpack.c.l.b16 %v1772
          %v1841 = vunpack.c.l.b16 %v1775
          %v1842 = vunpack.c.l.b16 %v1778
          %v1843 = vunpack.c.l.b16 %v1781
          %v1844 = vunpack.c.l.b16 %v1784
          %v1845 = vunpack.c.l.b16 %v1787
          %v1846 = vunpack.c.l.b16 %v1790
          %v1847 = vpack.c.b16 %v1839, %v1839
          %v1848 = vpack.c.b16 %v1840, %v1840
          %v1849 = vpack.c.b16 %v1841, %v1841
          %v1850 = vpack.c.b16 %v1842, %v1842
          %v1851 = vpack.c.b16 %v1843, %v1843
          %v1852 = vpack.c.b16 %v1844, %v1844
          %v1853 = vpack.c.b16 %v1845, %v1845
          %v1854 = vpack.c.b16 %v1846, %v1846
          %v1856 = vshrl.u32 %v1823, 16
          %v1858 = vshll.u32 %v1823, 16
          %v1860 = vrot.slane %v1858, 1
          %v1861 = vor.u32 %v1856, %v1860
          %v1863 = vshll.u32 %v1847, 16
          %v1865 = vrot.slane %v1863, 1
          %v1866 = vsel %vm968, %v1861, %v1865
          %v1868 = vshrl.u32 %v1824, 16
          %v1870 = vshll.u32 %v1824, 16
          %v1872 = vrot.slane %v1870, 1
          %v1873 = vor.u32 %v1868, %v1872
          %v1875 = vshll.u32 %v1848, 16
          %v1877 = vrot.slane %v1875, 1
          %v1878 = vsel %vm968, %v1873, %v1877
          %v1880 = vshrl.u32 %v1825, 16
          %v1882 = vshll.u32 %v1825, 16
          %v1884 = vrot.slane %v1882, 1
          %v1885 = vor.u32 %v1880, %v1884
          %v1887 = vshll.u32 %v1849, 16
          %v1889 = vrot.slane %v1887, 1
          %v1890 = vsel %vm968, %v1885, %v1889
          %v1892 = vshrl.u32 %v1826, 16
          %v1894 = vshll.u32 %v1826, 16
          %v1896 = vrot.slane %v1894, 1
          %v1897 = vor.u32 %v1892, %v1896
          %v1899 = vshll.u32 %v1850, 16
          %v1901 = vrot.slane %v1899, 1
          %v1902 = vsel %vm968, %v1897, %v1901
          %v1904 = vshrl.u32 %v1827, 16
          %v1906 = vshll.u32 %v1827, 16
          %v1908 = vrot.slane %v1906, 1
          %v1909 = vor.u32 %v1904, %v1908
          %v1911 = vshll.u32 %v1851, 16
          %v1913 = vrot.slane %v1911, 1
          %v1914 = vsel %vm968, %v1909, %v1913
          %v1916 = vshrl.u32 %v1828, 16
          %v1918 = vshll.u32 %v1828, 16
          %v1920 = vrot.slane %v1918, 1
          %v1921 = vor.u32 %v1916, %v1920
          %v1923 = vshll.u32 %v1852, 16
          %v1925 = vrot.slane %v1923, 1
          %v1926 = vsel %vm968, %v1921, %v1925
          %v1928 = vshrl.u32 %v1829, 16
          %v1930 = vshll.u32 %v1829, 16
          %v1932 = vrot.slane %v1930, 1
          %v1933 = vor.u32 %v1928, %v1932
          %v1935 = vshll.u32 %v1853, 16
          %v1937 = vrot.slane %v1935, 1
          %v1938 = vsel %vm968, %v1933, %v1937
          %v1940 = vshrl.u32 %v1830, 16
          %v1942 = vshll.u32 %v1830, 16
          %v1944 = vrot.slane %v1942, 1
          %v1945 = vor.u32 %v1940, %v1944
          %v1947 = vshll.u32 %v1854, 16
          %v1949 = vrot.slane %v1947, 1
          %v1950 = vsel %vm968, %v1945, %v1949
          %1951 = vrot.lane.b32.xlu0 %v1866, 32
          %v1952 = vpop.permute.xlu0 %1951
          %1953 = vrot.lane.b32.xlu0 %v1878, 32
          %v1954 = vpop.permute.xlu0 %1953
          %1955 = vrot.lane.b32.xlu0 %v1890, 32
          %v1956 = vpop.permute.xlu0 %1955
          %1957 = vrot.lane.b32.xlu0 %v1902, 32
          %v1958 = vpop.permute.xlu0 %1957
          %1959 = vrot.lane.b32.xlu0 %v1914, 32
          %v1960 = vpop.permute.xlu0 %1959
          %1961 = vrot.lane.b32.xlu0 %v1926, 32
          %v1962 = vpop.permute.xlu0 %1961
          %1963 = vrot.lane.b32.xlu0 %v1938, 32
          %v1964 = vpop.permute.xlu0 %1963
          %1965 = vrot.lane.b32.xlu0 %v1950, 32
          %v1966 = vpop.permute.xlu0 %1965
          %v1967 = vrot.slane %v1823, 1
          %v1968 = vrot.slane %v1847, 1
          %v1969 = vsel %vm1081, %v1967, %v1968
          %v1970 = vrot.slane %v1824, 1
          %v1971 = vrot.slane %v1848, 1
          %v1972 = vsel %vm1081, %v1970, %v1971
          %v1973 = vrot.slane %v1825, 1
          %v1974 = vrot.slane %v1849, 1
          %v1975 = vsel %vm1081, %v1973, %v1974
          %v1976 = vrot.slane %v1826, 1
          %v1977 = vrot.slane %v1850, 1
          %v1978 = vsel %vm1081, %v1976, %v1977
          %v1979 = vrot.slane %v1827, 1
          %v1980 = vrot.slane %v1851, 1
          %v1981 = vsel %vm1081, %v1979, %v1980
          %v1982 = vrot.slane %v1828, 1
          %v1983 = vrot.slane %v1852, 1
          %v1984 = vsel %vm1081, %v1982, %v1983
          %v1985 = vrot.slane %v1829, 1
          %v1986 = vrot.slane %v1853, 1
          %v1987 = vsel %vm1081, %v1985, %v1986
          %v1988 = vrot.slane %v1830, 1
          %v1989 = vrot.slane %v1854, 1
          %v1990 = vsel %vm1081, %v1988, %v1989
          %1991 = vrot.lane.b32.xlu0 %v1969, 64
          %v1992 = vpop.permute.xlu0 %1991
          %1993 = vrot.lane.b32.xlu0 %v1972, 64
          %v1994 = vpop.permute.xlu0 %1993
          %1995 = vrot.lane.b32.xlu0 %v1975, 64
          %v1996 = vpop.permute.xlu0 %1995
          %1997 = vrot.lane.b32.xlu0 %v1978, 64
          %v1998 = vpop.permute.xlu0 %1997
          %1999 = vrot.lane.b32.xlu0 %v1981, 64
          %v2000 = vpop.permute.xlu0 %1999
          %2001 = vrot.lane.b32.xlu0 %v1984, 64
          %v2002 = vpop.permute.xlu0 %2001
          %2003 = vrot.lane.b32.xlu0 %v1987, 64
          %v2004 = vpop.permute.xlu0 %2003
          %2005 = vrot.lane.b32.xlu0 %v1990, 64
          %v2006 = vpop.permute.xlu0 %2005
          %v2008 = vsel %vm1122, %v1823, %v1952
          %v2010 = vsel %vm1122, %v1824, %v1954
          %v2012 = vsel %vm1122, %v1825, %v1956
          %v2014 = vsel %vm1122, %v1826, %v1958
          %v2016 = vsel %vm1122, %v1827, %v1960
          %v2018 = vsel %vm1122, %v1828, %v1962
          %v2020 = vsel %vm1122, %v1829, %v1964
          %v2022 = vsel %vm1122, %v1830, %v1966
          %v2024 = vsel %vm1139, %v2008, %v1992
          %v2026 = vsel %vm1139, %v2010, %v1994
          %v2028 = vsel %vm1139, %v2012, %v1996
          %v2030 = vsel %vm1139, %v2014, %v1998
          %v2032 = vsel %vm1139, %v2016, %v2000
          %v2034 = vsel %vm1139, %v2018, %v2002
          %v2036 = vsel %vm1139, %v2020, %v2004
          %v2038 = vsel %vm1139, %v2022, %v2006
          %v2051 = vunpack.c.l.b16 %v851
          %v2052 = vunpack.c.l.b16 %v852
          %v2053 = vunpack.c.l.b16 %v853
          %v2054 = vunpack.c.l.b16 %v854
          %v2055 = vunpack.c.l.b16 %v855
          %v2056 = vunpack.c.l.b16 %v856
          %v2057 = vunpack.c.l.b16 %v857
          %v2058 = vunpack.c.l.b16 %v858
          %v2059 = vunpack.c.l.b16 %v859
          %v2060 = vunpack.c.l.b16 %v860
          %v2061 = vunpack.c.l.b16 %v861
          %v2062 = vunpack.c.l.b16 %v862
          %v2063 = vpack.c.b16 %v2052, %v2051
          %v2064 = vpack.c.b16 %v2054, %v2053
          %v2065 = vpack.c.b16 %v2056, %v2055
          %v2066 = vpack.c.b16 %v2058, %v2057
          %v2067 = vpack.c.b16 %v2060, %v2059
          %v2068 = vpack.c.b16 %v2062, %v2061
          %v2075 = vsel %vm1192, %v2024, 0
          %v2077 = vsel %vm1192, %v2026, 0
          %v2079 = vsel %vm1192, %v2028, 0
          %v2081 = vsel %vm1192, %v2030, 0
          %v2083 = vsel %vm1192, %v2032, 0
          %v2085 = vsel %vm1192, %v2034, 0
          %v2087 = vsel %vm1192, %v2036, 0
          %v2089 = vsel %vm1192, %v2038, 0
          %2091 = vmatprep.subr.bf16.mxu0 0
          %2092 = vmatpush1.bf16.msra.mxu0 %v2063
          %2093 = vmatprep.subr.bf16.mxu0 0
          %2094 = vmatpush1.bf16.msra.mxu0 %v2064
          %2095 = vmatprep.subr.bf16.mxu0 0
          %2096 = vmatpush1.bf16.msra.mxu0 %v2065
          %2097 = vmatprep.subr.bf16.mxu0 0
          %2098 = vmatpush1.bf16.msra.mxu0 %v2066
          %2099 = vmatprep.subr.bf16.mxu0 0
          %2100 = vmatpush1.bf16.msra.mxu0 %v2067
          %2101 = vmatprep.subr.bf16.mxu0 0
          %2102 = vmatpush1.bf16.msra.mxu0 %v2068
          %2103 = vmatprep.subr.bf16.mxu0 0
          %2104 = vmatpush1.bf16.msra.mxu0 0
          %2105 = vmatprep.subr.bf16.mxu0 0
          %2106 = vmatpush1.bf16.msra.mxu0 0
          %2107 = vmatprep.subr.bf16.mxu0 0
          %2108 = vmatpush1.bf16.msra.mxu0 0
          %2109 = vmatprep.subr.bf16.mxu0 0
          %2110 = vmatpush1.bf16.msra.mxu0 0
          %2111 = vmatprep.subr.bf16.mxu0 0
          %2112 = vmatpush1.bf16.msra.mxu0 0
          %2113 = vmatprep.subr.bf16.mxu0 0
          %2114 = vmatpush1.bf16.msra.mxu0 0
          %2115 = vmatprep.subr.bf16.mxu0 0
          %2116 = vmatpush1.bf16.msra.mxu0 0
          %2117 = vmatprep.subr.bf16.mxu0 0
          %2118 = vmatpush1.bf16.msra.mxu0 0
          %2119 = vmatprep.subr.bf16.mxu0 0
          %2120 = vmatpush1.bf16.msra.mxu0 0
          %2121 = vmatprep.subr.bf16.mxu0 0
          %2122 = vmatpush1.bf16.msra.mxu0 0
          %2123 = vmatprep.mubr.bf16.mxu0 0
          %2124 = vmatmul.mubr.bf16.gmra.mrb[0].mxu0 %v2075
          %v2125 = vpop.f32.mrb[0].mxu0
          %v2126 = vadd.f32 0.0, %v2125
          %v2127 = vpop.f32.mrb[0].mxu0
          %v2128 = vpop.f32.mrb[0].mxu0
          %v2129 = vadd.f32 0.0, %v2128
          %v2130 = vpop.f32.mrb[0].mxu0
          %2131 = vmatprep.mubr.bf16.mxu0 0
          %2132 = vmatmul.mubr.bf16.gmra.mrb[0].mxu0 %v2077
          %v2133 = vpop.f32.mrb[0].mxu0
          %v2134 = vadd.f32 0.0, %v2133
          %v2135 = vpop.f32.mrb[0].mxu0
          %v2136 = vpop.f32.mrb[0].mxu0
          %v2137 = vadd.f32 0.0, %v2136
          %v2138 = vpop.f32.mrb[0].mxu0
          %2139 = vmatprep.mubr.bf16.mxu0 0
          %2140 = vmatmul.mubr.bf16.gmra.mrb[0].mxu0 %v2079
          %v2141 = vpop.f32.mrb[0].mxu0
          %v2142 = vadd.f32 0.0, %v2141
          %v2143 = vpop.f32.mrb[0].mxu0
          %v2144 = vpop.f32.mrb[0].mxu0
          %v2145 = vadd.f32 0.0, %v2144
          %v2146 = vpop.f32.mrb[0].mxu0
          %2147 = vmatprep.mubr.bf16.mxu0 0
          %2148 = vmatmul.mubr.bf16.gmra.mrb[0].mxu0 %v2081
          %v2149 = vpop.f32.mrb[0].mxu0
          %v2150 = vadd.f32 0.0, %v2149
          %v2151 = vpop.f32.mrb[0].mxu0
          %v2152 = vpop.f32.mrb[0].mxu0
          %v2153 = vadd.f32 0.0, %v2152
          %v2154 = vpop.f32.mrb[0].mxu0
          %2155 = vmatprep.mubr.bf16.mxu0 0
          %2156 = vmatmul.mubr.bf16.gmra.mrb[0].mxu0 %v2083
          %v2157 = vpop.f32.mrb[0].mxu0
          %v2158 = vadd.f32 0.0, %v2157
          %v2159 = vpop.f32.mrb[0].mxu0
          %v2160 = vpop.f32.mrb[0].mxu0
          %v2161 = vadd.f32 0.0, %v2160
          %v2162 = vpop.f32.mrb[0].mxu0
          %2163 = vmatprep.mubr.bf16.mxu0 0
          %2164 = vmatmul.mubr.bf16.gmra.mrb[0].mxu0 %v2085
          %v2165 = vpop.f32.mrb[0].mxu0
          %v2166 = vadd.f32 0.0, %v2165
          %v2167 = vpop.f32.mrb[0].mxu0
          %v2168 = vpop.f32.mrb[0].mxu0
          %v2169 = vadd.f32 0.0, %v2168
          %v2170 = vpop.f32.mrb[0].mxu0
          %2171 = vmatprep.mubr.bf16.mxu0 0
          %2172 = vmatmul.mubr.bf16.gmra.mrb[0].mxu0 %v2087
          %v2173 = vpop.f32.mrb[0].mxu0
          %v2174 = vadd.f32 0.0, %v2173
          %v2175 = vpop.f32.mrb[0].mxu0
          %v2176 = vpop.f32.mrb[0].mxu0
          %v2177 = vadd.f32 0.0, %v2176
          %v2178 = vpop.f32.mrb[0].mxu0
          %2179 = vmatprep.mubr.bf16.mxu0 0
          %2180 = vmatmul.mubr.bf16.gmra.mrb[0].mxu0 %v2089
          %v2181 = vpop.f32.mrb[0].mxu0
          %v2182 = vadd.f32 0.0, %v2181
          %v2183 = vpop.f32.mrb[0].mxu0
          %v2184 = vpop.f32.mrb[0].mxu0
          %v2185 = vadd.f32 0.0, %v2184
          %v2186 = vpop.f32.mrb[0].mxu0
          %2187 = vdwg.mxu0
          %v2188 = vadd.f32 %v1747, %v2126
          %v2189 = vadd.f32 %v1748, %v2129
          %v2190 = vadd.f32 %v1749, %v2134
          %v2191 = vadd.f32 %v1750, %v2137
          %v2192 = vadd.f32 %v1751, %v2142
          %v2193 = vadd.f32 %v1752, %v2145
          %v2194 = vadd.f32 %v1753, %v2150
          %v2195 = vadd.f32 %v1754, %v2153
          %v2196 = vadd.f32 %v1755, %v2158
          %v2197 = vadd.f32 %v1756, %v2161
          %v2198 = vadd.f32 %v1757, %v2166
          %v2199 = vadd.f32 %v1758, %v2169
          %v2200 = vadd.f32 %v1759, %v2174
          %v2201 = vadd.f32 %v1760, %v2177
          %v2202 = vadd.f32 %v1761, %v2182
          %v2203 = vadd.f32 %v1762, %v2185
          %v2204 = vxor.u32 %v2188, 2147483648
          %v2205 = vxor.u32 %v2189, 2147483648
          %v2206 = vxor.u32 %v2190, 2147483648
          %v2207 = vxor.u32 %v2191, 2147483648
          %v2208 = vxor.u32 %v2192, 2147483648
          %v2209 = vxor.u32 %v2193, 2147483648
          %v2210 = vxor.u32 %v2194, 2147483648
          %v2211 = vxor.u32 %v2195, 2147483648
          %v2212 = vxor.u32 %v2196, 2147483648
          %v2213 = vxor.u32 %v2197, 2147483648
          %v2214 = vxor.u32 %v2198, 2147483648
          %v2215 = vxor.u32 %v2199, 2147483648
          %v2216 = vxor.u32 %v2200, 2147483648
          %v2217 = vxor.u32 %v2201, 2147483648
          %v2218 = vxor.u32 %v2202, 2147483648
          %v2219 = vxor.u32 %v2203, 2147483648
          %v2220 = vmul.f32 %v2204, 1.442695
          %v2221 = vpow.pop %v2220
          %v2222 = vmul.f32 %v2205, 1.442695
          %v2223 = vpow.pop %v2222
          %v2224 = vmul.f32 %v2206, 1.442695
          %v2225 = vpow.pop %v2224
          %v2226 = vmul.f32 %v2207, 1.442695
          %v2227 = vpow.pop %v2226
          %v2228 = vmul.f32 %v2208, 1.442695
          %v2229 = vpow.pop %v2228
          %v2230 = vmul.f32 %v2209, 1.442695
          %v2231 = vpow.pop %v2230
          %v2232 = vmul.f32 %v2210, 1.442695
          %v2233 = vpow.pop %v2232
          %v2234 = vmul.f32 %v2211, 1.442695
          %v2235 = vpow.pop %v2234
          %v2236 = vmul.f32 %v2212, 1.442695
          %v2237 = vpow.pop %v2236
          %v2238 = vmul.f32 %v2213, 1.442695
          %v2239 = vpow.pop %v2238
          %v2240 = vmul.f32 %v2214, 1.442695
          %v2241 = vpow.pop %v2240
          %v2242 = vmul.f32 %v2215, 1.442695
          %v2243 = vpow.pop %v2242
          %v2244 = vmul.f32 %v2216, 1.442695
          %v2245 = vpow.pop %v2244
          %v2246 = vmul.f32 %v2217, 1.442695
          %v2247 = vpow.pop %v2246
          %v2248 = vmul.f32 %v2218, 1.442695
          %v2249 = vpow.pop %v2248
          %v2250 = vmul.f32 %v2219, 1.442695
          %v2251 = vpow.pop %v2250
          %v2252 = vadd.f32 %v2221, 1.0
          %v2253 = vadd.f32 %v2223, 1.0
          %v2254 = vadd.f32 %v2225, 1.0
          %v2255 = vadd.f32 %v2227, 1.0
          %v2256 = vadd.f32 %v2229, 1.0
          %v2257 = vadd.f32 %v2231, 1.0
          %v2258 = vadd.f32 %v2233, 1.0
          %v2259 = vadd.f32 %v2235, 1.0
          %v2260 = vadd.f32 %v2237, 1.0
          %v2261 = vadd.f32 %v2239, 1.0
          %v2262 = vadd.f32 %v2241, 1.0
          %v2263 = vadd.f32 %v2243, 1.0
          %v2264 = vadd.f32 %v2245, 1.0
          %v2265 = vadd.f32 %v2247, 1.0
          %v2266 = vadd.f32 %v2249, 1.0
          %v2267 = vadd.f32 %v2251, 1.0
          %v2268 = vrcp.pop %v2252
          %v2269 = vmul.f32 1.0, %v2268
          %v2270 = vrcp.pop %v2253
          %v2271 = vmul.f32 1.0, %v2270
          %v2272 = vrcp.pop %v2254
          %v2273 = vmul.f32 1.0, %v2272
          %v2274 = vrcp.pop %v2255
          %v2275 = vmul.f32 1.0, %v2274
          %v2276 = vrcp.pop %v2256
          %v2277 = vmul.f32 1.0, %v2276
          %v2278 = vrcp.pop %v2257
          %v2279 = vmul.f32 1.0, %v2278
          %v2280 = vrcp.pop %v2258
          %v2281 = vmul.f32 1.0, %v2280
          %v2282 = vrcp.pop %v2259
          %v2283 = vmul.f32 1.0, %v2282
          %v2284 = vrcp.pop %v2260
          %v2285 = vmul.f32 1.0, %v2284
          %v2286 = vrcp.pop %v2261
          %v2287 = vmul.f32 1.0, %v2286
          %v2288 = vrcp.pop %v2262
          %v2289 = vmul.f32 1.0, %v2288
          %v2290 = vrcp.pop %v2263
          %v2291 = vmul.f32 1.0, %v2290
          %v2292 = vrcp.pop %v2264
          %v2293 = vmul.f32 1.0, %v2292
          %v2294 = vrcp.pop %v2265
          %v2295 = vmul.f32 1.0, %v2294
          %v2296 = vrcp.pop %v2266
          %v2297 = vmul.f32 1.0, %v2296
          %v2298 = vrcp.pop %v2267
          %v2299 = vmul.f32 1.0, %v2298
          %vm2300 = vcmask 64512
          %v2301 = vsel %vm2300, %v2188, %v2269
          %v2302 = vsel %vm2300, %v2189, %v2271
          %v2303 = vsel %vm2300, %v2190, %v2273
          %v2304 = vsel %vm2300, %v2191, %v2275
          %v2305 = vsel %vm2300, %v2192, %v2277
          %v2306 = vsel %vm2300, %v2193, %v2279
          %v2307 = vsel %vm2300, %v2194, %v2281
          %v2308 = vsel %vm2300, %v2195, %v2283
          %v2309 = vsel %vm2300, %v2196, %v2285
          %v2310 = vsel %vm2300, %v2197, %v2287
          %v2311 = vsel %vm2300, %v2198, %v2289
          %v2312 = vsel %vm2300, %v2199, %v2291
          %v2313 = vsel %vm2300, %v2200, %v2293
          %v2314 = vsel %vm2300, %v2201, %v2295
          %v2315 = vsel %vm2300, %v2202, %v2297
          %v2316 = vsel %vm2300, %v2203, %v2299
          %s2317 = smul.u32 %s876, 16
          %s2318 = scalar_lea.vmem %s245, %s2317 [#allocation3]
          %vm2319 = vcmask 130048
          %2320 = vst.msk [vmem:[%s2318] sm:$0xff] %vm2319, %v2301
          %2321 = vst.msk [vmem:[%s2318 + $0x8] sm:$0xff] %vm2319, %v2302
          %2322 = vst.msk [vmem:[%s2318 + $0x10] sm:$0xff] %vm2319, %v2303
          %2323 = vst.msk [vmem:[%s2318 + $0x18] sm:$0xff] %vm2319, %v2304
          %2324 = vst.msk [vmem:[%s2318 + $0x20] sm:$0xff] %vm2319, %v2305
          %2325 = vst.msk [vmem:[%s2318 + $0x28] sm:$0xff] %vm2319, %v2306
          %2326 = vst.msk [vmem:[%s2318 + $0x30] sm:$0xff] %vm2319, %v2307
          %2327 = vst.msk [vmem:[%s2318 + $0x38] sm:$0xff] %vm2319, %v2308
          %2328 = vst.msk [vmem:[%s2318 + $0x40] sm:$0xff] %vm2319, %v2309
          %2329 = vst.msk [vmem:[%s2318 + $0x48] sm:$0xff] %vm2319, %v2310
          %2330 = vst.msk [vmem:[%s2318 + $0x50] sm:$0xff] %vm2319, %v2311
          %2331 = vst.msk [vmem:[%s2318 + $0x58] sm:$0xff] %vm2319, %v2312
          %2332 = vst.msk [vmem:[%s2318 + $0x60] sm:$0xff] %vm2319, %v2313
          %2333 = vst.msk [vmem:[%s2318 + $0x68] sm:$0xff] %vm2319, %v2314
          %2334 = vst.msk [vmem:[%s2318 + $0x70] sm:$0xff] %vm2319, %v2315
          %2335 = vst.msk [vmem:[%s2318 + $0x78] sm:$0xff] %vm2319, %v2316
          %v2336 = vmul.f32 %v2188, %v2188
          %v2337 = vmul.f32 %v2189, %v2189
          %v2338 = vmul.f32 %v2190, %v2190
          %v2339 = vmul.f32 %v2191, %v2191
          %v2340 = vmul.f32 %v2192, %v2192
          %v2341 = vmul.f32 %v2193, %v2193
          %v2342 = vmul.f32 %v2194, %v2194
          %v2343 = vmul.f32 %v2195, %v2195
          %v2344 = vmul.f32 %v2196, %v2196
          %v2345 = vmul.f32 %v2197, %v2197
          %v2346 = vmul.f32 %v2198, %v2198
          %v2347 = vmul.f32 %v2199, %v2199
          %v2348 = vmul.f32 %v2200, %v2200
          %v2349 = vmul.f32 %v2201, %v2201
          %v2350 = vmul.f32 %v2202, %v2202
          %v2351 = vmul.f32 %v2203, %v2203
          %v2352 = vadd.f32 %v2336, 1.0
          %v2353 = vadd.f32 %v2337, 1.0
          %v2354 = vadd.f32 %v2338, 1.0
          %v2355 = vadd.f32 %v2339, 1.0
          %v2356 = vadd.f32 %v2340, 1.0
          %v2357 = vadd.f32 %v2341, 1.0
          %v2358 = vadd.f32 %v2342, 1.0
          %v2359 = vadd.f32 %v2343, 1.0
          %v2360 = vadd.f32 %v2344, 1.0
          %v2361 = vadd.f32 %v2345, 1.0
          %v2362 = vadd.f32 %v2346, 1.0
          %v2363 = vadd.f32 %v2347, 1.0
          %v2364 = vadd.f32 %v2348, 1.0
          %v2365 = vadd.f32 %v2349, 1.0
          %v2366 = vadd.f32 %v2350, 1.0
          %v2367 = vadd.f32 %v2351, 1.0
          %2384 = vrot.lane.b32.xlu0 %v2352, 112
          %v2385 = vpop.permute.xlu0 %2384
          %2386 = vrot.lane.b32.xlu0 %v2353, 112
          %v2387 = vpop.permute.xlu0 %2386
          %2388 = vrot.lane.b32.xlu0 %v2354, 112
          %v2389 = vpop.permute.xlu0 %2388
          %2390 = vrot.lane.b32.xlu0 %v2355, 112
          %v2391 = vpop.permute.xlu0 %2390
          %2392 = vrot.lane.b32.xlu0 %v2356, 112
          %v2393 = vpop.permute.xlu0 %2392
          %2394 = vrot.lane.b32.xlu0 %v2357, 112
          %v2395 = vpop.permute.xlu0 %2394
          %2396 = vrot.lane.b32.xlu0 %v2358, 112
          %v2397 = vpop.permute.xlu0 %2396
          %2398 = vrot.lane.b32.xlu0 %v2359, 112
          %v2399 = vpop.permute.xlu0 %2398
          %2400 = vrot.lane.b32.xlu0 %v2360, 112
          %v2401 = vpop.permute.xlu0 %2400
          %2402 = vrot.lane.b32.xlu0 %v2361, 112
          %v2403 = vpop.permute.xlu0 %2402
          %2404 = vrot.lane.b32.xlu0 %v2362, 112
          %v2405 = vpop.permute.xlu0 %2404
          %2406 = vrot.lane.b32.xlu0 %v2363, 112
          %v2407 = vpop.permute.xlu0 %2406
          %2408 = vrot.lane.b32.xlu0 %v2364, 112
          %v2409 = vpop.permute.xlu0 %2408
          %2410 = vrot.lane.b32.xlu0 %v2365, 112
          %v2411 = vpop.permute.xlu0 %2410
          %2412 = vrot.lane.b32.xlu0 %v2366, 112
          %v2413 = vpop.permute.xlu0 %2412
          %2414 = vrot.lane.b32.xlu0 %v2367, 112
          %v2415 = vpop.permute.xlu0 %2414
          %s2432 = scalar_lea.vmem %s262, %s2317
          %vm2433 = vcmask 7168
          %2434 = vst.msk [vmem:[%s2432] sm:$0xff] %vm2433, %v2385
          %2435 = vst.msk [vmem:[%s2432 + $0x8] sm:$0xff] %vm2433, %v2387
          %2436 = vst.msk [vmem:[%s2432 + $0x10] sm:$0xff] %vm2433, %v2389
          %2437 = vst.msk [vmem:[%s2432 + $0x18] sm:$0xff] %vm2433, %v2391
          %2438 = vst.msk [vmem:[%s2432 + $0x20] sm:$0xff] %vm2433, %v2393
          %2439 = vst.msk [vmem:[%s2432 + $0x28] sm:$0xff] %vm2433, %v2395
          %2440 = vst.msk [vmem:[%s2432 + $0x30] sm:$0xff] %vm2433, %v2397
          %2441 = vst.msk [vmem:[%s2432 + $0x38] sm:$0xff] %vm2433, %v2399
          %2442 = vst.msk [vmem:[%s2432 + $0x40] sm:$0xff] %vm2433, %v2401
          %2443 = vst.msk [vmem:[%s2432 + $0x48] sm:$0xff] %vm2433, %v2403
          %2444 = vst.msk [vmem:[%s2432 + $0x50] sm:$0xff] %vm2433, %v2405
          %2445 = vst.msk [vmem:[%s2432 + $0x58] sm:$0xff] %vm2433, %v2407
          %2446 = vst.msk [vmem:[%s2432 + $0x60] sm:$0xff] %vm2433, %v2409
          %2447 = vst.msk [vmem:[%s2432 + $0x68] sm:$0xff] %vm2433, %v2411
          %2448 = vst.msk [vmem:[%s2432 + $0x70] sm:$0xff] %vm2433, %v2413
          %2449 = vst.msk [vmem:[%s2432 + $0x78] sm:$0xff] %vm2433, %v2415
        $region52: #{tpu_custom_call.1} parent=39 // loop_footer
          %s875 = sadd.s32 1, %s871
        $region53: #{tpu_custom_call.1} parent=39 // loop_footer_branch
          %870 = sbr.rel target = $region49
        $region54: #{tpu_custom_call.1} parent=39 // loop_exit
          _
        %s2450 = sand.u32 %s139, 1
        %s2451 = scalar_lea.sflag [#allocation4], %s2450
        %s2452 = sand.u32 %s139, 1
        %s2453 = smul.addr %s2452, 256
        %s2454 = scalar_lea.vmem [#allocation3], %s2453
        %p2455 = scmp.lt.s32.totalorder %s21, 1
        %s2456 = scalar_select %p2455, %s21, 1
        %s2457 = smul.addr %s2456, 32
        %s2458 = smul.addr %s2457, 8
        %s2459 = scalar_lea.vmem %s6, %s2458
        // Predicated region
        $region55: #{tpu_custom_call.1} parent=39 // pred_check
          %p2460 = pneg %p149
        $region56: #{tpu_custom_call.1} parent=39 // pred_check_branch
          %2462 = sbr.rel (%p2460) target = $region58
        $region57: #{tpu_custom_call.1} parent=39 // pred_region
          %s2464 = ssub.s32 4096, 4096
          %2465 = vsyncadd %s2451, %s2464
          %s2466 = smul.addr %s21, 32
          %s2467 = smul.addr %s2466, 128
          %s2468 = scalar_lea.hbm %s5, %s2467
          %s2469 = sshll.u32 %s2454, 4
          %s2470 = int_to_ptr.vmem [resolvable:$true] %s2469
          %2475 = dma.vmem_to_hbm [thread:$0]  %s2470, 4096, %s2468, %s2451, 128, 128, 8
        $region58: #{tpu_custom_call.1} parent=39 // pred_fallthru
          _
        // Predicated region
        $region59: #{tpu_custom_call.1} parent=39 // pred_check
          %p2476 = pneg %p175
        $region60: #{tpu_custom_call.1} parent=39 // pred_check_branch
          %2478 = sbr.rel (%p2476) target = $region62
        $region61: #{tpu_custom_call.1} parent=39 // pred_region
          _
        $region62: #{tpu_custom_call.1} parent=39 // pred_fallthru
          _
      $region40: #{tpu_custom_call.1} parent=5 // pred_fallthru
        _
      %p2479 = scmp.le.s32.totalorder 2, %s16
      // Predicated region
      $region63: #{tpu_custom_call.1} parent=5 // pred_check
        %p2480 = pneg %p2479
      $region64: #{tpu_custom_call.1} parent=5 // pred_check_branch
        %2482 = sbr.rel (%p2480) target = $region66
      $region65: #{tpu_custom_call.1} parent=5 // pred_region
        %s2483 = ssub.s32 %s16, 2
        // Predicated region
        $region67: #{tpu_custom_call.1} parent=65 // pred_check
          %p2484 = pneg %p155
        $region68: #{tpu_custom_call.1} parent=65 // pred_check_branch
          %2486 = sbr.rel (%p2484) target = $region70
        $region69: #{tpu_custom_call.1} parent=65 // pred_region
          %s2487 = sand.u32 %s140, 1
          %s2488 = scalar_lea.sflag [#allocation4], %s2487
          %s2489 = sand.u32 %s140, 1
          %s2490 = smul.addr %s2489, 256
          %s2491 = scalar_lea.vmem [#allocation3], %s2490
          %2492 = dma.done %s2488, 4096
        $region70: #{tpu_custom_call.1} parent=65 // pred_fallthru
          _
        // Predicated region
        $region71: #{tpu_custom_call.1} parent=65 // pred_check
          %p2493 = pneg %p181
        $region72: #{tpu_custom_call.1} parent=65 // pred_check_branch
          %2495 = sbr.rel (%p2493) target = $region74
        $region73: #{tpu_custom_call.1} parent=65 // pred_region
          %p2496 = scmp.lt.s32.totalorder %s22, 1
          %s2497 = scalar_select %p2496, %s22, 1
          %s2498 = smul.addr %s2497, 32
          %s2499 = smul.addr %s2498, 8
          %s2500 = scalar_lea.vmem %s6, %s2499
        $region74: #{tpu_custom_call.1} parent=65 // pred_fallthru
          _
      $region66: #{tpu_custom_call.1} parent=5 // pred_fallthru
        _
    $region6: #{tpu_custom_call.1} parent=1 // loop_footer
      %s20 = sadd.s32 1, %s16
    $region7: #{tpu_custom_call.1} parent=1 // loop_footer_branch
      %15 = sbr.rel target = $region3
    $region8: #{tpu_custom_call.1} parent=1 // loop_exit
      _
    %2501 = vsyncpa [#allocation4], 1
    %s2502 = scalar_lea.sflag [#allocation4], 1
    %2503 = vsyncpa %s2502, 1

</llo_original>
